<compile_context>
chip_gen: v7x
topology: tpu7x:2x2x1
jax: 0.10.0
libtpu: 0.0.40
codegen_flags: <defaults>
</compile_context>

<pallas_src>
import functools

import numpy as np
import jax
import jax.numpy as jnp
from jax.experimental import pallas as pl
from jax.experimental.pallas import tpu as pltpu

OUT_LANES = 128  # padded output width (lane-dense stores)


# --------------------------------------------------------------------------------------
# Pallas kernel: one batch tile (Bt batch elements, node-major rows) per grid step.
# --------------------------------------------------------------------------------------
def gpm_kernel(x_ref, extra_ref, w1_ref, w2_ref, wroot_ref, wrel_ref,
               wft_ref, wfg_ref, out_ref, *,
               A, sel, num_nodes, batch_tile, n_pad_cols,
               inv_temperature, neg_slope):
    f32 = jnp.float32
    N, Bt = num_nodes, batch_tile
    R = A.shape[0]
    mm = lambda a, b: jnp.dot(a, b, preferred_element_type=f32)
    node = lambda v, i: v[i * Bt:(i + 1) * Bt, :]        # static, sublane-aligned slab

    x = x_ref[...]                                        # bf16 [N*Bt, Dp]

    # Temporal block: all (1,k) convs, biases, long-term maxpool pass-through and ReLUs
    # folded (host-side) into two dense, 128-padded matmuls.
    h = jnp.maximum(mm(x, w1_ref[...]), 0.0)              # f32 [N*Bt, H1p]
    t = jnp.maximum(mm(h.astype(x.dtype), w2_ref[...]), 0.0)  # f32 [N*Bt, Fp]
    t_lo = t.astype(x.dtype)

    # RGCN (mean aggregation, single layer): root part (+ bias via the ones column of t)
    # in one tall matmul; relation parts use (A_r T) W_r == A_r (T W_r) with A_r baked
    # in as python constants, so node mixing is a few scalar-weighted VPU adds.
    g_root = mm(t_lo, wroot_ref[...])                     # f32 [N*Bt, Fgp]
    g = {i: node(g_root, i) for i in sel}
    for r in range(R):
        v = mm(t_lo, wrel_ref[r])                         # f32 [N*Bt, Fgp]
        v_nodes = [node(v, j) for j in range(N)]
        for i in sel:
            for j in range(N):
                c = float(A[r, i, j])
                if c != 0.0:
                    g[i] = g[i] + c * v_nodes[j]

    # Final 1x1 conv as VPU multiply + lane reduction (no 1-column MXU passes),
    # only for the selected nodes; cash logit is exactly 0 as in the reference.
    wft = wft_ref[...]                                    # f32 [1, Fp]
    wfg = wfg_ref[...]                                    # f32 [1, Fgp]
    cols = [jnp.zeros((Bt, 1), f32)]
    for i in sel:
        gi = g[i]
        gi = jnp.where(gi > 0, gi, neg_slope * gi)        # LeakyReLU
        sc = (jnp.sum(node(t, i) * wft, axis=-1, keepdims=True)
              + jnp.sum(gi * wfg, axis=-1, keepdims=True))  # [Bt, 1]
        cols.append(sc)
    cols.append(jnp.zeros((Bt, n_pad_cols), f32))
    # extra = last_stocks*wf0 + final bias (real lanes) / -1e30 (padding lanes).
    logits = (jnp.concatenate(cols, axis=-1) + extra_ref[...]) * inv_temperature

    m = jnp.max(logits, axis=-1, keepdims=True)           # lane-axis softmax
    e = jnp.exp(logits - m)
    out_ref[...] = e * pl.reciprocal(jnp.sum(e, axis=-1, keepdims=True), approx=True)


# --------------------------------------------------------------------------------------
# Wrapper
# --------------------------------------------------------------------------------------
def _round_up(v, m):
    return ((v + m - 1) // m) * m


def _choose_batch_tile(batch, num_nodes, *, max_rows=2048, min_grid=2):
    """Batch tile Bt: multiple of 8 (sublane alignment of the node-major layout), capped
    so a tile's rows (num_nodes*Bt) keep the working set small in scoped VMEM on every
    generation, and capped at ceil(batch/min_grid) so the 'parallel' grid axis has >= 2
    steps whenever the batch allows (v7x has 2 TensorCores)."""
    cap_rows = max(8, ((max_rows // max(num_nodes, 1)) // 8) * 8)
    cap_grid = max(8, _round_up(-(-batch // min_grid), 8))
    return min(cap_rows, cap_grid)


def gpm_pallas_forward(observation, last_action, folded, *,
                       temperature=1.0, neg_slope=0.01):
    B, C, N, T = observation.shape
    sel = folded['sel']
    n_sel = len(sel)
    n_out = n_sel + 1
    assert last_action.shape[1] == n_out
    dims = folded['dims']
    Din, Dp = dims['Din'], dims['Dp']

    Bt = _choose_batch_tile(B, N)
    B_pad = _round_up(B, Bt)
    G = B_pad // Bt

    # ---- XLA-side glue: node-major, zero-padded, MXU-friendly input slab ----
    x_flat = jnp.transpose(observation, (2, 0, 1, 3)).reshape(N, B, C * T)
    long_raw = jnp.transpose(jnp.max(observation, axis=3), (2, 0, 1))     # [N, B, C]
    ones = jnp.ones((N, B, 1), observation.dtype)
    x_in = jnp.concatenate([x_flat, long_raw, ones], axis=-1)             # [N, B, Din]
    x_in = jnp.pad(x_in, ((0, 0), (0, B_pad - B), (0, Dp - Din)))
    # rows per grid step are node-major within each batch tile -> contiguous 2-D slab
    x_in = x_in.reshape(N, G, Bt, Dp).transpose(1, 0, 2, 3).reshape(G * N * Bt, Dp)
    x_in = x_in.astype(jnp.bfloat16)

    # extra: col 0 = cash (exactly 0), cols 1..n_sel = last_stocks*wf0 + final bias,
    # padding lanes = -1e30 so they vanish in the softmax; padded batch rows are zeros.
    extra = last_action[:, 1:] * folded['wf0'] + folded['bf']             # [B, n_sel]
    extra = jnp.concatenate([jnp.zeros((B, 1), extra.dtype), extra], axis=-1)
    extra = jnp.pad(extra, ((0, 0), (0, OUT_LANES - n_out)), constant_values=-1e30)
    extra = jnp.pad(extra, ((0, B_pad - B), (0, 0))).astype(jnp.float32)

    w1 = jnp.asarray(folded['W1f'], jnp.bfloat16)
    w2 = jnp.asarray(folded['W2f'], jnp.bfloat16)
    wroot = jnp.asarray(folded['Wroot'], jnp.bfloat16)
    wrel = jnp.asarray(folded['Wrel'], jnp.bfloat16)
    wft = jnp.asarray(folded['wft'], jnp.float32)
    wfg = jnp.asarray(folded['wfg'], jnp.float32)

    kernel = functools.partial(
        gpm_kernel,
        A=np.asarray(folded['A'], np.float32), sel=sel,
        num_nodes=N, batch_tile=Bt, n_pad_cols=OUT_LANES - n_out,
        inv_temperature=float(1.0 / temperature), neg_slope=float(neg_slope))

    out = pl.pallas_call(
        kernel,
        grid=(G,),
        in_specs=[
            pl.BlockSpec((N * Bt, Dp), lambda i: (i, 0)),          # x (node-major tile)
            pl.BlockSpec((Bt, OUT_LANES), lambda i: (i, 0)),       # extra
            pl.BlockSpec(w1.shape, lambda i: (0, 0)),
            pl.BlockSpec(w2.shape, lambda i: (0, 0)),
            pl.BlockSpec(wroot.shape, lambda i: (0, 0)),
            pl.BlockSpec(wrel.shape, lambda i: (0, 0, 0)),
            pl.BlockSpec(wft.shape, lambda i: (0, 0)),
            pl.BlockSpec(wfg.shape, lambda i: (0, 0)),
        ],
        out_specs=pl.BlockSpec((Bt, OUT_LANES), lambda i: (i, 0)),
        out_shape=jax.ShapeDtypeStruct((B_pad, OUT_LANES), jnp.float32),
        compiler_params=pltpu.CompilerParams(
            dimension_semantics=("parallel",),
            vmem_limit_bytes=32 * 1024 * 1024),
    )(x_in, extra, w1, w2, wroot, wrel, wft, wfg)

    return out[:B, :n_out]                                          # [B, n_sel+1]


# --------------------------------------------------------------------------------------
# Glue: conv -> matmul folding, graph aggregation matrices, parameter init
# --------------------------------------------------------------------------------------
def conv1xk_to_toeplitz(w, T):
    """w: [Cout, Cin, 1, K]  ->  M: [Cin*T, Cout*(T-K+1)] so that out = x_flat @ M."""
    Cout, Cin, _, K = w.shape
    n_out = T - K + 1
    M = np.zeros((Cin * T, Cout * n_out), np.float32)
    for co in range(Cout):
        for ci in range(Cin):
            for tau in range(n_out):
                M[ci * T + tau: ci * T + tau + K, co * n_out + tau] = w[co, ci, 0, :]
    return M


def conv_full_to_matrix(w):
    """w: [Cout, Cin, 1, L] (kernel spans full length) -> M: [Cin*L, Cout]."""
    Cout, Cin, _, L = w.shape
    M = np.zeros((Cin * L, Cout), np.float32)
    for co in range(Cout):
        for ci in range(Cin):
            M[ci * L:(ci + 1) * L, co] = w[co, ci, 0, :]
    return M


def build_relation_agg(edge_index, edge_type, num_relations, num_nodes):
    """Dense per-relation mean-aggregation matrices A_r[i, j] (edge j -> i)."""
    A = np.zeros((num_relations, num_nodes, num_nodes), np.float32)
    for e in range(edge_index.shape[1]):
        src, dst, r = int(edge_index[0, e]), int(edge_index[1, e]), int(edge_type[e])
        A[r, dst, src] += 1.0
    deg = A.sum(axis=2, keepdims=True)
    A = np.where(deg > 0, A / np.maximum(deg, 1.0), 0.0).astype(np.float32)
    return A


def fold_params(params, A, nodes_to_select, *, initial_features, time_window,
                k_short, k_medium):
    C, T = initial_features, time_window
    cm = params['w_s1'].shape[0]          # conv_mid_features
    Cf = params['w_s2'].shape[0]          # conv_final_features
    n_short = T - k_short + 1
    n_medium = T - k_medium + 1
    F = 2 * Cf + C
    R = A.shape[0]

    ws1 = conv1xk_to_toeplitz(params['w_s1'], T)       # [C*T, cm*n_short]
    wm1 = conv1xk_to_toeplitz(params['w_m1'], T)       # [C*T, cm*n_medium]
    ws2 = conv_full_to_matrix(params['w_s2'])          # [cm*n_short, Cf]
    wm2 = conv_full_to_matrix(params['w_m2'])          # [cm*n_medium, Cf]

    H1s, H1m = cm * n_short, cm * n_medium
    H1 = H1s + H1m + C + 1                 # [short | mid | long-pass-through | ones]
    Din = C * T + C + 1                    # [x_flat | long_raw | ones]

    # padded (MXU-friendly) sizes
    Dp, H1p = _round_up(Din, 128), _round_up(H1, 128)
    Fp, Fgp = _round_up(F + 1, 128), _round_up(F, 128)

    # First fused matmul: conv1(short) | conv1(mid) | long pass-through | ones, + biases.
    W1f = np.zeros((Dp, H1p), np.float32)
    W1f[:C * T, :H1s] = ws1
    W1f[:C * T, H1s:H1s + H1m] = wm1
    W1f[C * T:C * T + C, H1s + H1m:H1s + H1m + C] = np.eye(C, dtype=np.float32)
    W1f[Din - 1, :H1s] = np.repeat(params['b_s1'], n_short)
    W1f[Din - 1, H1s:H1s + H1m] = np.repeat(params['b_m1'], n_medium)
    W1f[Din - 1, H1 - 1] = 1.0

    # Second fused matmul -> temporal_ext = [short(Cf) | mid(Cf) | long(C) | ones | 0pad].
    W2f = np.zeros((H1p, Fp), np.float32)
    W2f[:H1s, :Cf] = ws2
    W2f[H1s:H1s + H1m, Cf:2 * Cf] = wm2
    W2f[H1s + H1m:H1s + H1m + C, 2 * Cf:2 * Cf + C] = np.eye(C, dtype=np.float32)
    W2f[H1 - 1, :Cf] = params['b_s2']
    W2f[H1 - 1, Cf:2 * Cf] = params['b_m2']
    W2f[H1 - 1, F] = 1.0

    # Graph weights, split per block (root carries the bias via the ones column of t).
    Wroot = np.zeros((Fp, Fgp), np.float32)
    Wroot[:F, :F] = params['w_root']
    Wroot[F, :F] = params['b_g']
    Wrel = np.zeros((R, Fp, Fgp), np.float32)
    for r in range(R):
        Wrel[r, :F, :F] = params['w_rel'][r]

    wf = params['w_fin'][0, :, 0, 0]                   # [2F+1]: [last, temporal(F), graph(F)]
    wft = np.zeros((1, Fp), np.float32)
    wft[0, :F] = wf[1:F + 1]
    wfg = np.zeros((1, Fgp), np.float32)
    wfg[0, :F] = wf[F + 1:]

    return dict(W1f=W1f, W2f=W2f, Wroot=Wroot, Wrel=Wrel, wft=wft, wfg=wfg,
                wf0=np.float32(wf[0]), bf=np.float32(params['b_fin'][0]),
                A=np.asarray(A, np.float32),
                sel=tuple(int(n) for n in np.asarray(nodes_to_select)),
                dims=dict(Din=Din, Dp=Dp, H1=H1, H1p=H1p, F=F, Fp=Fp, Fgp=Fgp))


def init_params(key, *, initial_features, k_short, k_medium, conv_mid, conv_final,
                time_window, num_relations):
    n_short = time_window - k_short + 1
    n_medium = time_window - k_medium + 1
    F = 2 * conv_final + initial_features
    shapes = dict(
        w_s1=(conv_mid, initial_features, 1, k_short), b_s1=(conv_mid,),
        w_s2=(conv_final, conv_mid, 1, n_short), b_s2=(conv_final,),
        w_m1=(conv_mid, initial_features, 1, k_medium), b_m1=(conv_mid,),
        w_m2=(conv_final, conv_mid, 1, n_medium), b_m2=(conv_final,),
        w_rel=(num_relations, F, F), w_root=(F, F), b_g=(F,),
        w_fin=(1, 2 * F + 1, 1, 1), b_fin=(1,),
    )
    keys = jax.random.split(key, len(shapes))
    params = {}
    for (name, shp), k in zip(shapes.items(), keys):
        params[name] = np.asarray(0.1 * jax.random.normal(k, shp, jnp.float32))
    return params


# --------------------------------------------------------------------------------------
# Pure numpy reference (direct convolutions) to validate the kernel
# --------------------------------------------------------------------------------------
def reference_forward(obs, last_action, params, A, nodes_to_select, *,
                      temperature=1.0, neg_slope=0.01):
    obs = np.asarray(obs, np.float64)
    la = np.asarray(last_action, np.float64)
    B = obs.shape[0]

    def conv(x, w, b):
        _, Cin, _, T = x.shape
        Cout, _, _, K = w.shape
        n_out = T - K + 1
        w = np.asarray(w, np.float64)
        out = np.zeros((x.shape[0], Cout, x.shape[2], n_out))
        for k in range(K):
            out += np.einsum('bcnt,oc->bont', x[:, :, :, k:k + n_out], w[:, :, 0, k])
        return out + np.asarray(b, np.float64)[None, :, None, None]

    relu = lambda v: np.maximum(v, 0.0)
    short = relu(conv(relu(conv(obs, params['w_s1'], params['b_s1'])),
                      params['w_s2'], params['b_s2']))
    mid = relu(conv(relu(conv(obs, params['w_m1'], params['b_m1'])),
                    params['w_m2'], params['b_m2']))
    long_f = relu(obs.max(axis=3, keepdims=True))
    temporal = np.concatenate([short, mid, long_f], axis=1)           # [B, F, N, 1]
    X = temporal[:, :, :, 0].transpose(0, 2, 1)                       # [B, N, F]

    g = X @ np.asarray(params['w_root'], np.float64) + np.asarray(params['b_g'], np.float64)
    for r in range(A.shape[0]):
        g = g + (np.asarray(A[r], np.float64) @ X) @ np.asarray(params['w_rel'][r], np.float64)
    g = np.where(g > 0, g, neg_slope * g)

    feat = np.concatenate([X, g], axis=2)                             # [B, N, 2F]
    sel = feat[:, np.asarray(nodes_to_select), :]
    last_stocks = la[:, 1:]
    ff = np.concatenate([last_stocks[:, :, None], sel], axis=2)       # [B, n_sel, 2F+1]
    wf = np.asarray(params['w_fin'], np.float64)[0, :, 0, 0]
    scores = ff @ wf + float(params['b_fin'][0])
    logits = np.concatenate([np.zeros((B, 1)), scores], axis=1) / temperature
    e = np.exp(logits - logits.max(axis=1, keepdims=True))
    return e / e.sum(axis=1, keepdims=True)


# --------------------------------------------------------------------------------------
if __name__ == "__main__":
    B, C, N, T = 2, 3, 6, 50                 # batch, initial_features, stocks/nodes, window
    k_short, k_medium = 3, 21
    conv_mid, conv_final = 3, 20

    edge_index = np.array([[0, 1, 2, 3, 4, 5, 0, 2, 4, 1],
                           [1, 2, 3, 4, 5, 0, 3, 5, 1, 4]], np.int64)
    edge_type = np.array([0, 0, 0, 0, 0, 0, 1, 1, 1, 1], np.int64)
    nodes_to_select = np.arange(N)
    num_relations = int(np.unique(edge_type).shape[0])

    key = jax.random.PRNGKey(0)
    k_obs, k_act, k_par = jax.random.split(key, 3)
    observation = jax.random.normal(k_obs, (B, C, N, T), jnp.float32)
    raw = jax.random.uniform(k_act, (B, N + 1), jnp.float32)
    last_action = raw / jnp.sum(raw, axis=1, keepdims=True)

    params = init_params(k_par, initial_features=C, k_short=k_short, k_medium=k_medium,
                         conv_mid=conv_mid, conv_final=conv_final, time_window=T,
                         num_relations=num_relations)
    A = build_relation_agg(edge_index, edge_type, num_relations, N)
    folded = fold_params(params, A, nodes_to_select, initial_features=C,
                         time_window=T, k_short=k_short, k_medium=k_medium)

    out = gpm_pallas_forward(observation, last_action, folded, temperature=1.0)
    out = jax.block_until_ready(out)

    ref = reference_forward(observation, last_action, params, A, nodes_to_select)
    # bf16 matmul operands (f32 accumulation) -> slightly looser tolerance than pure f32
    np.testing.assert_allclose(np.asarray(out), ref, atol=2e-2, rtol=2e-2)
    assert np.allclose(np.asarray(out).sum(axis=1), 1.0, atol=5e-3)
    print("KERNEL_OK")
</pallas_src>

<mosaic_0001>
module attributes {stable_mosaic.version = 11 : i64} {
  func.func @gpm_kernel(%arg0: i32, %arg1: memref<48x256xbf16, #tpu.memory_space<vmem>>, %arg2: memref<8x128xf32, #tpu.memory_space<vmem>>, %arg3: memref<256x256xbf16, #tpu.memory_space<vmem>>, %arg4: memref<256x128xbf16, #tpu.memory_space<vmem>>, %arg5: memref<128x128xbf16, #tpu.memory_space<vmem>>, %arg6: memref<2x128x128xbf16, #tpu.memory_space<vmem>>, %arg7: memref<1x128xf32, #tpu.memory_space<vmem>>, %arg8: memref<1x128xf32, #tpu.memory_space<vmem>>, %arg9: memref<8x128xf32, #tpu.memory_space<vmem>>) attributes {dimension_semantics = [#tpu.dimension_semantics<parallel>], iteration_bounds = array<i64: 1>, scalar_prefetch = 0 : i64, scratch_operands = 0 : i64, tpu.core_type = #tpu.core_type<tc>, window_params = [{transform_indices = @transform_0, window_bounds = array<i64: 48, 256>}, {transform_indices = @transform_1, window_bounds = array<i64: 8, 128>}, {pipeline_mode = #tpu.pipeline_mode<synchronous>, transform_indices = @transform_2, window_bounds = array<i64: 256, 256>}, {pipeline_mode = #tpu.pipeline_mode<synchronous>, transform_indices = @transform_3, window_bounds = array<i64: 256, 128>}, {pipeline_mode = #tpu.pipeline_mode<synchronous>, transform_indices = @transform_4, window_bounds = array<i64: 128, 128>}, {pipeline_mode = #tpu.pipeline_mode<synchronous>, transform_indices = @transform_5, window_bounds = array<i64: 2, 128, 128>}, {pipeline_mode = #tpu.pipeline_mode<synchronous>, transform_indices = @transform_6, window_bounds = array<i64: 1, 128>}, {pipeline_mode = #tpu.pipeline_mode<synchronous>, transform_indices = @transform_7, window_bounds = array<i64: 1, 128>}, {transform_indices = @transform_8, window_bounds = array<i64: 8, 128>}]} {
    %c0 = arith.constant 0 : index
    %c0_0 = arith.constant 0 : index
    %0 = vector.load %arg1[%c0, %c0_0] : memref<48x256xbf16, #tpu.memory_space<vmem>>, vector<48x256xbf16>
    %c0_1 = arith.constant 0 : index
    %c0_2 = arith.constant 0 : index
    %1 = vector.load %arg3[%c0_1, %c0_2] : memref<256x256xbf16, #tpu.memory_space<vmem>>, vector<256x256xbf16>
    %cst = arith.constant dense<0.000000e+00> : vector<48x256xf32>
    %2 = tpu.matmul %0, %1, %cst {dimension_numbers = #tpu.dot_dimension_numbers<[1], [0], [0], [1], [0, 0, 1, 1], [], []>} : vector<48x256xbf16>, vector<256x256xbf16>, vector<48x256xf32> -> vector<48x256xf32>
    %cst_3 = arith.constant 0.000000e+00 : f32
    %3 = vector.broadcast %cst_3 : f32 to vector<48x256xf32>
    %4 = arith.maximumf %2, %3 : vector<48x256xf32>
    %5 = arith.truncf %4 : vector<48x256xf32> to vector<48x256xbf16>
    %c0_4 = arith.constant 0 : index
    %c0_5 = arith.constant 0 : index
    %6 = vector.load %arg4[%c0_4, %c0_5] : memref<256x128xbf16, #tpu.memory_space<vmem>>, vector<256x128xbf16>
    %cst_6 = arith.constant dense<0.000000e+00> : vector<48x128xf32>
    %7 = tpu.matmul %5, %6, %cst_6 {dimension_numbers = #tpu.dot_dimension_numbers<[1], [0], [0], [1], [0, 0, 1, 1], [], []>} : vector<48x256xbf16>, vector<256x128xbf16>, vector<48x128xf32> -> vector<48x128xf32>
    %cst_7 = arith.constant 0.000000e+00 : f32
    %8 = vector.broadcast %cst_7 : f32 to vector<48x128xf32>
    %9 = arith.maximumf %7, %8 : vector<48x128xf32>
    %10 = arith.truncf %9 : vector<48x128xf32> to vector<48x128xbf16>
    %c0_8 = arith.constant 0 : index
    %c0_9 = arith.constant 0 : index
    %11 = vector.load %arg5[%c0_8, %c0_9] : memref<128x128xbf16, #tpu.memory_space<vmem>>, vector<128x128xbf16>
    %cst_10 = arith.constant dense<0.000000e+00> : vector<48x128xf32>
    %12 = tpu.matmul %10, %11, %cst_10 {dimension_numbers = #tpu.dot_dimension_numbers<[1], [0], [0], [1], [0, 0, 1, 1], [], []>} : vector<48x128xbf16>, vector<128x128xbf16>, vector<48x128xf32> -> vector<48x128xf32>
    %13 = vector.extract_strided_slice %12 {offsets = [0, 0], sizes = [8, 128], strides = [1, 1]} : vector<48x128xf32> to vector<8x128xf32>
    %14 = vector.extract_strided_slice %12 {offsets = [8, 0], sizes = [8, 128], strides = [1, 1]} : vector<48x128xf32> to vector<8x128xf32>
    %15 = vector.extract_strided_slice %12 {offsets = [16, 0], sizes = [8, 128], strides = [1, 1]} : vector<48x128xf32> to vector<8x128xf32>
    %16 = vector.extract_strided_slice %12 {offsets = [24, 0], sizes = [8, 128], strides = [1, 1]} : vector<48x128xf32> to vector<8x128xf32>
    %17 = vector.extract_strided_slice %12 {offsets = [32, 0], sizes = [8, 128], strides = [1, 1]} : vector<48x128xf32> to vector<8x128xf32>
    %18 = vector.extract_strided_slice %12 {offsets = [40, 0], sizes = [8, 128], strides = [1, 1]} : vector<48x128xf32> to vector<8x128xf32>
    %c0_11 = arith.constant 0 : index
    %c0_12 = arith.constant 0 : index
    %c0_13 = arith.constant 0 : index
    %19 = vector.load %arg6[%c0_11, %c0_12, %c0_13] : memref<2x128x128xbf16, #tpu.memory_space<vmem>>, vector<1x128x128xbf16>
    %20 = vector.shape_cast %19 : vector<1x128x128xbf16> to vector<128x128xbf16>
    %cst_14 = arith.constant dense<0.000000e+00> : vector<48x128xf32>
    %21 = tpu.matmul %10, %20, %cst_14 {dimension_numbers = #tpu.dot_dimension_numbers<[1], [0], [0], [1], [0, 0, 1, 1], [], []>} : vector<48x128xbf16>, vector<128x128xbf16>, vector<48x128xf32> -> vector<48x128xf32>
    %22 = vector.extract_strided_slice %21 {offsets = [0, 0], sizes = [8, 128], strides = [1, 1]} : vector<48x128xf32> to vector<8x128xf32>
    %23 = vector.extract_strided_slice %21 {offsets = [8, 0], sizes = [8, 128], strides = [1, 1]} : vector<48x128xf32> to vector<8x128xf32>
    %24 = vector.extract_strided_slice %21 {offsets = [16, 0], sizes = [8, 128], strides = [1, 1]} : vector<48x128xf32> to vector<8x128xf32>
    %25 = vector.extract_strided_slice %21 {offsets = [24, 0], sizes = [8, 128], strides = [1, 1]} : vector<48x128xf32> to vector<8x128xf32>
    %26 = vector.extract_strided_slice %21 {offsets = [32, 0], sizes = [8, 128], strides = [1, 1]} : vector<48x128xf32> to vector<8x128xf32>
    %27 = vector.extract_strided_slice %21 {offsets = [40, 0], sizes = [8, 128], strides = [1, 1]} : vector<48x128xf32> to vector<8x128xf32>
    %cst_15 = arith.constant 1.000000e+00 : f32
    %28 = vector.broadcast %cst_15 : f32 to vector<8x128xf32>
    %29 = arith.mulf %28, %27 : vector<8x128xf32>
    %30 = arith.addf %13, %29 : vector<8x128xf32>
    %cst_16 = arith.constant 1.000000e+00 : f32
    %31 = vector.broadcast %cst_16 : f32 to vector<8x128xf32>
    %32 = arith.mulf %31, %22 : vector<8x128xf32>
    %33 = arith.addf %14, %32 : vector<8x128xf32>
    %cst_17 = arith.constant 1.000000e+00 : f32
    %34 = vector.broadcast %cst_17 : f32 to vector<8x128xf32>
    %35 = arith.mulf %34, %23 : vector<8x128xf32>
    %36 = arith.addf %15, %35 : vector<8x128xf32>
    %cst_18 = arith.constant 1.000000e+00 : f32
    %37 = vector.broadcast %cst_18 : f32 to vector<8x128xf32>
    %38 = arith.mulf %37, %24 : vector<8x128xf32>
    %39 = arith.addf %16, %38 : vector<8x128xf32>
    %cst_19 = arith.constant 1.000000e+00 : f32
    %40 = vector.broadcast %cst_19 : f32 to vector<8x128xf32>
    %41 = arith.mulf %40, %25 : vector<8x128xf32>
    %42 = arith.addf %17, %41 : vector<8x128xf32>
    %cst_20 = arith.constant 1.000000e+00 : f32
    %43 = vector.broadcast %cst_20 : f32 to vector<8x128xf32>
    %44 = arith.mulf %43, %26 : vector<8x128xf32>
    %45 = arith.addf %18, %44 : vector<8x128xf32>
    %c1 = arith.constant 1 : index
    %c0_21 = arith.constant 0 : index
    %c0_22 = arith.constant 0 : index
    %46 = vector.load %arg6[%c1, %c0_21, %c0_22] : memref<2x128x128xbf16, #tpu.memory_space<vmem>>, vector<1x128x128xbf16>
    %47 = vector.shape_cast %46 : vector<1x128x128xbf16> to vector<128x128xbf16>
    %cst_23 = arith.constant dense<0.000000e+00> : vector<48x128xf32>
    %48 = tpu.matmul %10, %47, %cst_23 {dimension_numbers = #tpu.dot_dimension_numbers<[1], [0], [0], [1], [0, 0, 1, 1], [], []>} : vector<48x128xbf16>, vector<128x128xbf16>, vector<48x128xf32> -> vector<48x128xf32>
    %49 = vector.extract_strided_slice %48 {offsets = [0, 0], sizes = [8, 128], strides = [1, 1]} : vector<48x128xf32> to vector<8x128xf32>
    %50 = vector.extract_strided_slice %48 {offsets = [8, 0], sizes = [8, 128], strides = [1, 1]} : vector<48x128xf32> to vector<8x128xf32>
    %51 = vector.extract_strided_slice %48 {offsets = [16, 0], sizes = [8, 128], strides = [1, 1]} : vector<48x128xf32> to vector<8x128xf32>
    %52 = vector.extract_strided_slice %48 {offsets = [32, 0], sizes = [8, 128], strides = [1, 1]} : vector<48x128xf32> to vector<8x128xf32>
    %cst_24 = arith.constant 1.000000e+00 : f32
    %53 = vector.broadcast %cst_24 : f32 to vector<8x128xf32>
    %54 = arith.mulf %53, %52 : vector<8x128xf32>
    %55 = arith.addf %33, %54 : vector<8x128xf32>
    %cst_25 = arith.constant 1.000000e+00 : f32
    %56 = vector.broadcast %cst_25 : f32 to vector<8x128xf32>
    %57 = arith.mulf %56, %49 : vector<8x128xf32>
    %58 = arith.addf %39, %57 : vector<8x128xf32>
    %cst_26 = arith.constant 1.000000e+00 : f32
    %59 = vector.broadcast %cst_26 : f32 to vector<8x128xf32>
    %60 = arith.mulf %59, %50 : vector<8x128xf32>
    %61 = arith.addf %42, %60 : vector<8x128xf32>
    %cst_27 = arith.constant 1.000000e+00 : f32
    %62 = vector.broadcast %cst_27 : f32 to vector<8x128xf32>
    %63 = arith.mulf %62, %51 : vector<8x128xf32>
    %64 = arith.addf %45, %63 : vector<8x128xf32>
    %c0_28 = arith.constant 0 : index
    %c0_29 = arith.constant 0 : index
    %65 = vector.load %arg7[%c0_28, %c0_29] : memref<1x128xf32, #tpu.memory_space<vmem>>, vector<1x128xf32>
    %c0_30 = arith.constant 0 : index
    %c0_31 = arith.constant 0 : index
    %66 = vector.load %arg8[%c0_30, %c0_31] : memref<1x128xf32, #tpu.memory_space<vmem>>, vector<1x128xf32>
    %cst_32 = arith.constant 0.000000e+00 : f32
    %67 = vector.broadcast %cst_32 : f32 to vector<8x1xf32>
    %cst_33 = arith.constant 0.000000e+00 : f32
    %68 = vector.broadcast %cst_33 : f32 to vector<8x128xf32>
    %69 = arith.cmpf ogt, %30, %68 : vector<8x128xf32>
    %cst_34 = arith.constant 0.00999999977 : f32
    %70 = vector.broadcast %cst_34 : f32 to vector<8x128xf32>
    %71 = arith.mulf %70, %30 : vector<8x128xf32>
    %72 = arith.select %69, %30, %71 : vector<8x128xi1>, vector<8x128xf32>
    %73 = vector.extract_strided_slice %9 {offsets = [0, 0], sizes = [8, 128], strides = [1, 1]} : vector<48x128xf32> to vector<8x128xf32>
    %74 = vector.broadcast %65 : vector<1x128xf32> to vector<8x128xf32>
    %75 = arith.mulf %73, %74 : vector<8x128xf32>
    %cst_35 = arith.constant dense<0.000000e+00> : vector<8xf32>
    %76 = vector.multi_reduction <add>, %75, %cst_35 [1] : vector<8x128xf32> to vector<8xf32>
    %77 = vector.shape_cast %76 : vector<8xf32> to vector<8x1xf32>
    %78 = vector.broadcast %66 : vector<1x128xf32> to vector<8x128xf32>
    %79 = arith.mulf %72, %78 : vector<8x128xf32>
    %cst_36 = arith.constant dense<0.000000e+00> : vector<8xf32>
    %80 = vector.multi_reduction <add>, %79, %cst_36 [1] : vector<8x128xf32> to vector<8xf32>
    %81 = vector.shape_cast %80 : vector<8xf32> to vector<8x1xf32>
    %82 = arith.addf %77, %81 : vector<8x1xf32>
    %cst_37 = arith.constant 0.000000e+00 : f32
    %83 = vector.broadcast %cst_37 : f32 to vector<8x128xf32>
    %84 = arith.cmpf ogt, %55, %83 : vector<8x128xf32>
    %cst_38 = arith.constant 0.00999999977 : f32
    %85 = vector.broadcast %cst_38 : f32 to vector<8x128xf32>
    %86 = arith.mulf %85, %55 : vector<8x128xf32>
    %87 = arith.select %84, %55, %86 : vector<8x128xi1>, vector<8x128xf32>
    %88 = vector.extract_strided_slice %9 {offsets = [8, 0], sizes = [8, 128], strides = [1, 1]} : vector<48x128xf32> to vector<8x128xf32>
    %89 = vector.broadcast %65 : vector<1x128xf32> to vector<8x128xf32>
    %90 = arith.mulf %88, %89 : vector<8x128xf32>
    %cst_39 = arith.constant dense<0.000000e+00> : vector<8xf32>
    %91 = vector.multi_reduction <add>, %90, %cst_39 [1] : vector<8x128xf32> to vector<8xf32>
    %92 = vector.shape_cast %91 : vector<8xf32> to vector<8x1xf32>
    %93 = vector.broadcast %66 : vector<1x128xf32> to vector<8x128xf32>
    %94 = arith.mulf %87, %93 : vector<8x128xf32>
    %cst_40 = arith.constant dense<0.000000e+00> : vector<8xf32>
    %95 = vector.multi_reduction <add>, %94, %cst_40 [1] : vector<8x128xf32> to vector<8xf32>
    %96 = vector.shape_cast %95 : vector<8xf32> to vector<8x1xf32>
    %97 = arith.addf %92, %96 : vector<8x1xf32>
    %cst_41 = arith.constant 0.000000e+00 : f32
    %98 = vector.broadcast %cst_41 : f32 to vector<8x128xf32>
    %99 = arith.cmpf ogt, %36, %98 : vector<8x128xf32>
    %cst_42 = arith.constant 0.00999999977 : f32
    %100 = vector.broadcast %cst_42 : f32 to vector<8x128xf32>
    %101 = arith.mulf %100, %36 : vector<8x128xf32>
    %102 = arith.select %99, %36, %101 : vector<8x128xi1>, vector<8x128xf32>
    %103 = vector.extract_strided_slice %9 {offsets = [16, 0], sizes = [8, 128], strides = [1, 1]} : vector<48x128xf32> to vector<8x128xf32>
    %104 = vector.broadcast %65 : vector<1x128xf32> to vector<8x128xf32>
    %105 = arith.mulf %103, %104 : vector<8x128xf32>
    %cst_43 = arith.constant dense<0.000000e+00> : vector<8xf32>
    %106 = vector.multi_reduction <add>, %105, %cst_43 [1] : vector<8x128xf32> to vector<8xf32>
    %107 = vector.shape_cast %106 : vector<8xf32> to vector<8x1xf32>
    %108 = vector.broadcast %66 : vector<1x128xf32> to vector<8x128xf32>
    %109 = arith.mulf %102, %108 : vector<8x128xf32>
    %cst_44 = arith.constant dense<0.000000e+00> : vector<8xf32>
    %110 = vector.multi_reduction <add>, %109, %cst_44 [1] : vector<8x128xf32> to vector<8xf32>
    %111 = vector.shape_cast %110 : vector<8xf32> to vector<8x1xf32>
    %112 = arith.addf %107, %111 : vector<8x1xf32>
    %cst_45 = arith.constant 0.000000e+00 : f32
    %113 = vector.broadcast %cst_45 : f32 to vector<8x128xf32>
    %114 = arith.cmpf ogt, %58, %113 : vector<8x128xf32>
    %cst_46 = arith.constant 0.00999999977 : f32
    %115 = vector.broadcast %cst_46 : f32 to vector<8x128xf32>
    %116 = arith.mulf %115, %58 : vector<8x128xf32>
    %117 = arith.select %114, %58, %116 : vector<8x128xi1>, vector<8x128xf32>
    %118 = vector.extract_strided_slice %9 {offsets = [24, 0], sizes = [8, 128], strides = [1, 1]} : vector<48x128xf32> to vector<8x128xf32>
    %119 = vector.broadcast %65 : vector<1x128xf32> to vector<8x128xf32>
    %120 = arith.mulf %118, %119 : vector<8x128xf32>
    %cst_47 = arith.constant dense<0.000000e+00> : vector<8xf32>
    %121 = vector.multi_reduction <add>, %120, %cst_47 [1] : vector<8x128xf32> to vector<8xf32>
    %122 = vector.shape_cast %121 : vector<8xf32> to vector<8x1xf32>
    %123 = vector.broadcast %66 : vector<1x128xf32> to vector<8x128xf32>
    %124 = arith.mulf %117, %123 : vector<8x128xf32>
    %cst_48 = arith.constant dense<0.000000e+00> : vector<8xf32>
    %125 = vector.multi_reduction <add>, %124, %cst_48 [1] : vector<8x128xf32> to vector<8xf32>
    %126 = vector.shape_cast %125 : vector<8xf32> to vector<8x1xf32>
    %127 = arith.addf %122, %126 : vector<8x1xf32>
    %cst_49 = arith.constant 0.000000e+00 : f32
    %128 = vector.broadcast %cst_49 : f32 to vector<8x128xf32>
    %129 = arith.cmpf ogt, %61, %128 : vector<8x128xf32>
    %cst_50 = arith.constant 0.00999999977 : f32
    %130 = vector.broadcast %cst_50 : f32 to vector<8x128xf32>
    %131 = arith.mulf %130, %61 : vector<8x128xf32>
    %132 = arith.select %129, %61, %131 : vector<8x128xi1>, vector<8x128xf32>
    %133 = vector.extract_strided_slice %9 {offsets = [32, 0], sizes = [8, 128], strides = [1, 1]} : vector<48x128xf32> to vector<8x128xf32>
    %134 = vector.broadcast %65 : vector<1x128xf32> to vector<8x128xf32>
    %135 = arith.mulf %133, %134 : vector<8x128xf32>
    %cst_51 = arith.constant dense<0.000000e+00> : vector<8xf32>
    %136 = vector.multi_reduction <add>, %135, %cst_51 [1] : vector<8x128xf32> to vector<8xf32>
    %137 = vector.shape_cast %136 : vector<8xf32> to vector<8x1xf32>
    %138 = vector.broadcast %66 : vector<1x128xf32> to vector<8x128xf32>
    %139 = arith.mulf %132, %138 : vector<8x128xf32>
    %cst_52 = arith.constant dense<0.000000e+00> : vector<8xf32>
    %140 = vector.multi_reduction <add>, %139, %cst_52 [1] : vector<8x128xf32> to vector<8xf32>
    %141 = vector.shape_cast %140 : vector<8xf32> to vector<8x1xf32>
    %142 = arith.addf %137, %141 : vector<8x1xf32>
    %cst_53 = arith.constant 0.000000e+00 : f32
    %143 = vector.broadcast %cst_53 : f32 to vector<8x128xf32>
    %144 = arith.cmpf ogt, %64, %143 : vector<8x128xf32>
    %cst_54 = arith.constant 0.00999999977 : f32
    %145 = vector.broadcast %cst_54 : f32 to vector<8x128xf32>
    %146 = arith.mulf %145, %64 : vector<8x128xf32>
    %147 = arith.select %144, %64, %146 : vector<8x128xi1>, vector<8x128xf32>
    %148 = vector.extract_strided_slice %9 {offsets = [40, 0], sizes = [8, 128], strides = [1, 1]} : vector<48x128xf32> to vector<8x128xf32>
    %149 = vector.broadcast %65 : vector<1x128xf32> to vector<8x128xf32>
    %150 = arith.mulf %148, %149 : vector<8x128xf32>
    %cst_55 = arith.constant dense<0.000000e+00> : vector<8xf32>
    %151 = vector.multi_reduction <add>, %150, %cst_55 [1] : vector<8x128xf32> to vector<8xf32>
    %152 = vector.shape_cast %151 : vector<8xf32> to vector<8x1xf32>
    %153 = vector.broadcast %66 : vector<1x128xf32> to vector<8x128xf32>
    %154 = arith.mulf %147, %153 : vector<8x128xf32>
    %cst_56 = arith.constant dense<0.000000e+00> : vector<8xf32>
    %155 = vector.multi_reduction <add>, %154, %cst_56 [1] : vector<8x128xf32> to vector<8xf32>
    %156 = vector.shape_cast %155 : vector<8xf32> to vector<8x1xf32>
    %157 = arith.addf %152, %156 : vector<8x1xf32>
    %cst_57 = arith.constant 0.000000e+00 : f32
    %158 = vector.broadcast %cst_57 : f32 to vector<8x121xf32>
    %159 = tpu.concatenate %67, %82, %97, %112, %127, %142, %157, %158 in 1 : vector<8x1xf32>, vector<8x1xf32>, vector<8x1xf32>, vector<8x1xf32>, vector<8x1xf32>, vector<8x1xf32>, vector<8x1xf32>, vector<8x121xf32> -> vector<8x128xf32>
    %c0_58 = arith.constant 0 : index
    %c0_59 = arith.constant 0 : index
    %160 = vector.load %arg2[%c0_58, %c0_59] : memref<8x128xf32, #tpu.memory_space<vmem>>, vector<8x128xf32>
    %161 = arith.addf %159, %160 : vector<8x128xf32>
    %cst_60 = arith.constant 1.000000e+00 : f32
    %162 = vector.broadcast %cst_60 : f32 to vector<8x128xf32>
    %163 = arith.mulf %161, %162 : vector<8x128xf32>
    %cst_61 = arith.constant dense<0xFF800000> : vector<8xf32>
    %164 = vector.multi_reduction <maximumf>, %163, %cst_61 [1] : vector<8x128xf32> to vector<8xf32>
    %165 = vector.shape_cast %164 : vector<8xf32> to vector<8x1xf32>
    %166 = vector.broadcast %165 : vector<8x1xf32> to vector<8x128xf32>
    %167 = arith.subf %163, %166 : vector<8x128xf32>
    %168 = math.exp %167 : vector<8x128xf32>
    %cst_62 = arith.constant dense<0.000000e+00> : vector<8xf32>
    %169 = vector.multi_reduction <add>, %168, %cst_62 [1] : vector<8x128xf32> to vector<8xf32>
    %170 = vector.shape_cast %169 : vector<8xf32> to vector<8x1xf32>
    %171 = tpu.reciprocal %170 {approx = true} : vector<8x1xf32> -> vector<8x1xf32>
    %172 = vector.broadcast %171 : vector<8x1xf32> to vector<8x128xf32>
    %173 = arith.mulf %168, %172 : vector<8x128xf32>
    %c0_63 = arith.constant 0 : index
    %c0_64 = arith.constant 0 : index
    %174 = vector.load %arg9[%c0_63, %c0_64] : memref<8x128xf32, #tpu.memory_space<vmem>>, vector<8x128xf32>
    tpu.vector_store %arg9[%c0_63, %c0_64], %173 {strides = array<i32>} : memref<8x128xf32, #tpu.memory_space<vmem>>, vector<8x128xf32>,
    return
  }
  func.func @transform_0(%arg0: i32) -> (i32, i32) {
    %c0_i32 = arith.constant 0 : i32
    %c0_i32_0 = arith.constant 0 : i32
    return %arg0, %c0_i32 : i32, i32
  }
  func.func @transform_1(%arg0: i32) -> (i32, i32) {
    %c0_i32 = arith.constant 0 : i32
    %c0_i32_0 = arith.constant 0 : i32
    return %arg0, %c0_i32 : i32, i32
  }
  func.func @transform_2(%arg0: i32) -> (i32, i32) {
    %c0_i32 = arith.constant 0 : i32
    %c0_i32_0 = arith.constant 0 : i32
    %c0_i32_1 = arith.constant 0 : i32
    return %c0_i32, %c0_i32_0 : i32, i32
  }
  func.func @transform_3(%arg0: i32) -> (i32, i32) {
    %c0_i32 = arith.constant 0 : i32
    %c0_i32_0 = arith.constant 0 : i32
    %c0_i32_1 = arith.constant 0 : i32
    return %c0_i32, %c0_i32_0 : i32, i32
  }
  func.func @transform_4(%arg0: i32) -> (i32, i32) {
    %c0_i32 = arith.constant 0 : i32
    %c0_i32_0 = arith.constant 0 : i32
    %c0_i32_1 = arith.constant 0 : i32
    return %c0_i32, %c0_i32_0 : i32, i32
  }
  func.func @transform_5(%arg0: i32) -> (i32, i32, i32) {
    %c0_i32 = arith.constant 0 : i32
    %c0_i32_0 = arith.constant 0 : i32
    %c0_i32_1 = arith.constant 0 : i32
    %c0_i32_2 = arith.constant 0 : i32
    return %c0_i32, %c0_i32_0, %c0_i32_1 : i32, i32, i32
  }
  func.func @transform_6(%arg0: i32) -> (i32, i32) {
    %c0_i32 = arith.constant 0 : i32
    %c0_i32_0 = arith.constant 0 : i32
    %c0_i32_1 = arith.constant 0 : i32
    return %c0_i32, %c0_i32_0 : i32, i32
  }
  func.func @transform_7(%arg0: i32) -> (i32, i32) {
    %c0_i32 = arith.constant 0 : i32
    %c0_i32_0 = arith.constant 0 : i32
    %c0_i32_1 = arith.constant 0 : i32
    return %c0_i32, %c0_i32_0 : i32, i32
  }
  func.func @transform_8(%arg0: i32) -> (i32, i32) {
    %c0_i32 = arith.constant 0 : i32
    %c0_i32_0 = arith.constant 0 : i32
    return %arg0, %c0_i32 : i32, i32
  }
}

</mosaic_0001>

<llo_original>
// kernel: tpu_custom_call.1
$region0: #{tpu_custom_call.1}
  #allocation0 [shape = 'u32[]', space=smem, size = 0x4, offset = 0x4, fixed_abs, tag = 'smem constant byte address 0x4 - core index']
  #allocation1 [shape = 'u32[144,128]{1,0:T(1,128)}', space=vmem, size = 0x12000, scoped, tag = 'internal scratch']
  %s0 = inlined_call_operand.hbm [shape: bf16[48,256], index: 0, kind: input, shape index: {}]
  %s1 = inlined_call_operand.hbm [shape: f32[8,128], index: 1, kind: input, shape index: {}]
  %s2 = inlined_call_operand.hbm [shape: bf16[256,256], index: 2, kind: input, shape index: {}]
  %s3 = inlined_call_operand.hbm [shape: bf16[256,128], index: 3, kind: input, shape index: {}]
  %s4 = inlined_call_operand.hbm [shape: bf16[128,128], index: 4, kind: input, shape index: {}]
  %s5 = inlined_call_operand.hbm [shape: bf16[2,128,128], index: 5, kind: input, shape index: {}]
  %s6 = inlined_call_operand.vmem [shape: f32[1,128], index: 6, kind: input, shape index: {}]
  %s7 = inlined_call_operand.vmem [shape: f32[1,128], index: 7, kind: input, shape index: {}]
  %s8 = inlined_call_operand.hbm [shape: f32[8,128], index: 8, kind: output, shape index: {}]
  %s9 = sld [smem:[#allocation0]]
  $region66: #{tpu_custom_call.1} parent=0
    _
  %s11 = ssub.s32 1, %s9
  %s12 = scalar_select 0, %s11, %s9
  $region1: #{tpu_custom_call.1} parent=0
    #allocation2 [shape = 'u8[24576]{0}', space=vmem, size = 0x6000, scoped, tag = 'input window, operand 0, single buffered']
    #allocation3 [shape = 's32[1]{0}', space=sflag, size = 0x4, scoped, tag = 'scoped memory for tpu_custom_call.1']
    #allocation4 [shape = 's32[1]{0}', space=sflag, size = 0x4, scoped, tag = 'scoped memory for tpu_custom_call.1']
    #allocation5 [shape = 'u8[4096]{0}', space=vmem, size = 0x1000, scoped, tag = 'input window, operand 1, single buffered']
    #allocation6 [shape = 's32[1]{0}', space=sflag, size = 0x4, scoped, tag = 'scoped memory for tpu_custom_call.1']
    #allocation7 [shape = 'u8[131072]{0}', space=vmem, size = 0x20000, scoped, tag = 'input window, operand 2, single buffered']
    #allocation8 [shape = 'u8[65536]{0}', space=vmem, size = 0x10000, scoped, tag = 'input window, operand 3, single buffered']
    #allocation9 [shape = 's32[1]{0}', space=sflag, size = 0x4, scoped, tag = 'scoped memory for tpu_custom_call.1']
    #allocation10 [shape = 'u8[32768]{0}', space=vmem, size = 0x8000, scoped, tag = 'input window, operand 4, single buffered']
    #allocation11 [shape = 'u8[65536]{0}', space=vmem, size = 0x10000, scoped, tag = 'input window, operand 5, single buffered']
    #allocation12 [shape = 's32[1]{0}', space=sflag, size = 0x4, scoped, tag = 'scoped memory for tpu_custom_call.1']
    #allocation13 [shape = 'u8[4096]{0}', space=vmem, size = 0x1000, scoped, tag = 'output window, operand 0, single buffered']
    %13 = vsyncpa [#allocation3], 0
    %14 = vsyncpa [#allocation6], 0
    %15 = vsyncpa [#allocation9], 0
    %16 = vsyncpa [#allocation12], 0
    %17 = vsyncpa [#allocation4], 0
    // Predicated region
    $region2: #{tpu_custom_call.1} parent=1 // pred_check
      _
    $region3: #{tpu_custom_call.1} parent=1 // pred_check_branch
      %19 = sbr.rel (0) target = $region5
    $region4: #{tpu_custom_call.1} parent=1 // pred_region
      %s21 = ssub.s32 768, 768
      %22 = vsyncadd [#allocation3], %s21
      %s23 = sshll.u32 [#allocation2], 4
      %s24 = int_to_ptr.vmem [resolvable:$true] %s23
      %29 = dma.hbm_to_vmem [thread:$0]  %s0, 768, %s24, [#allocation3], 128, 128, 8
    $region5: #{tpu_custom_call.1} parent=1 // pred_fallthru
      _
    // Predicated region
    $region6: #{tpu_custom_call.1} parent=1 // pred_check
      _
    $region7: #{tpu_custom_call.1} parent=1 // pred_check_branch
      %31 = sbr.rel (0) target = $region9
    $region8: #{tpu_custom_call.1} parent=1 // pred_region
      %s33 = ssub.s32 128, 128
      %34 = vsyncadd [#allocation6], %s33
      %s36 = sshll.u32 [#allocation5], 4
      %s37 = int_to_ptr.vmem [resolvable:$true] %s36
      %39 = dma.hbm_to_vmem [thread:$0]  %s1, 128, %s37, [#allocation6]
    $region9: #{tpu_custom_call.1} parent=1 // pred_fallthru
      _
    // Predicated region
    $region10: #{tpu_custom_call.1} parent=1 // pred_check
      _
    $region11: #{tpu_custom_call.1} parent=1 // pred_check_branch
      %41 = sbr.rel (0) target = $region13
    $region12: #{tpu_custom_call.1} parent=1 // pred_region
      %s43 = ssub.s32 4096, 4096
      %44 = vsyncadd [#allocation6], %s43
      %s45 = sshll.u32 [#allocation7], 4
      %s46 = int_to_ptr.vmem [resolvable:$true] %s45
      %51 = dma.hbm_to_vmem [thread:$0]  %s2, 4096, %s46, [#allocation6], 128, 128, 8
    $region13: #{tpu_custom_call.1} parent=1 // pred_fallthru
      _
    // Predicated region
    $region14: #{tpu_custom_call.1} parent=1 // pred_check
      _
    $region15: #{tpu_custom_call.1} parent=1 // pred_check_branch
      %53 = sbr.rel (0) target = $region17
    $region16: #{tpu_custom_call.1} parent=1 // pred_region
      %s55 = ssub.s32 2048, 2048
      %56 = vsyncadd [#allocation9], %s55
      %s57 = sshll.u32 [#allocation8], 4
      %s58 = int_to_ptr.vmem [resolvable:$true] %s57
      %63 = dma.hbm_to_vmem [thread:$0]  %s3, 2048, %s58, [#allocation9], 64, 64, 4
    $region17: #{tpu_custom_call.1} parent=1 // pred_fallthru
      _
    // Predicated region
    $region18: #{tpu_custom_call.1} parent=1 // pred_check
      _
    $region19: #{tpu_custom_call.1} parent=1 // pred_check_branch
      %65 = sbr.rel (0) target = $region21
    $region20: #{tpu_custom_call.1} parent=1 // pred_region
      %s67 = ssub.s32 1024, 1024
      %68 = vsyncadd [#allocation9], %s67
      %s69 = sshll.u32 [#allocation10], 4
      %s70 = int_to_ptr.vmem [resolvable:$true] %s69
      %75 = dma.hbm_to_vmem [thread:$0]  %s4, 1024, %s70, [#allocation9], 64, 64, 4
    $region21: #{tpu_custom_call.1} parent=1 // pred_fallthru
      _
    // Predicated region
    $region22: #{tpu_custom_call.1} parent=1 // pred_check
      _
    $region23: #{tpu_custom_call.1} parent=1 // pred_check_branch
      %77 = sbr.rel (0) target = $region25
    $region24: #{tpu_custom_call.1} parent=1 // pred_region
      %s79 = ssub.s32 2048, 2048
      %80 = vsyncadd [#allocation12], %s79
      %s81 = sshll.u32 [#allocation11], 4
      %s82 = int_to_ptr.vmem [resolvable:$true] %s81
      %87 = dma.hbm_to_vmem [thread:$0]  %s5, 2048, %s82, [#allocation12], 64, 64, 4
    $region25: #{tpu_custom_call.1} parent=1 // pred_fallthru
      _
    // Predicated region
    $region26: #{tpu_custom_call.1} parent=1 // pred_check
      _
    $region27: #{tpu_custom_call.1} parent=1 // pred_check_branch
      %89 = sbr.rel (0) target = $region29
    $region28: #{tpu_custom_call.1} parent=1 // pred_region
      _
    $region29: #{tpu_custom_call.1} parent=1 // pred_fallthru
      _
    // Predicated region
    $region30: #{tpu_custom_call.1} parent=1 // pred_check
      _
    $region31: #{tpu_custom_call.1} parent=1 // pred_check_branch
      %91 = sbr.rel (0) target = $region33
    $region32: #{tpu_custom_call.1} parent=1 // pred_region
      _
    $region33: #{tpu_custom_call.1} parent=1 // pred_fallthru
      _
    // Predicated region
    $region34: #{tpu_custom_call.1} parent=1 // pred_check
      _
    $region35: #{tpu_custom_call.1} parent=1 // pred_check_branch
      %93 = sbr.rel (0) target = $region37
    $region36: #{tpu_custom_call.1} parent=1 // pred_region
      %94 = dma.done [#allocation3], 768
    $region37: #{tpu_custom_call.1} parent=1 // pred_fallthru
      _
    // Predicated region
    $region38: #{tpu_custom_call.1} parent=1 // pred_check
      _
    $region39: #{tpu_custom_call.1} parent=1 // pred_check_branch
      %96 = sbr.rel (0) target = $region41
    $region40: #{tpu_custom_call.1} parent=1 // pred_region
      %97 = dma.done [#allocation6], 128
    $region41: #{tpu_custom_call.1} parent=1 // pred_fallthru
      _
    // Predicated region
    $region42: #{tpu_custom_call.1} parent=1 // pred_check
      _
    $region43: #{tpu_custom_call.1} parent=1 // pred_check_branch
      %99 = sbr.rel (0) target = $region45
    $region44: #{tpu_custom_call.1} parent=1 // pred_region
      %100 = dma.done [#allocation6], 4096
    $region45: #{tpu_custom_call.1} parent=1 // pred_fallthru
      _
    // Predicated region
    $region46: #{tpu_custom_call.1} parent=1 // pred_check
      _
    $region47: #{tpu_custom_call.1} parent=1 // pred_check_branch
      %102 = sbr.rel (0) target = $region49
    $region48: #{tpu_custom_call.1} parent=1 // pred_region
      %103 = dma.done [#allocation9], 2048
    $region49: #{tpu_custom_call.1} parent=1 // pred_fallthru
      _
    // Predicated region
    $region50: #{tpu_custom_call.1} parent=1 // pred_check
      _
    $region51: #{tpu_custom_call.1} parent=1 // pred_check_branch
      %105 = sbr.rel (0) target = $region53
    $region52: #{tpu_custom_call.1} parent=1 // pred_region
      %106 = dma.done [#allocation9], 1024
    $region53: #{tpu_custom_call.1} parent=1 // pred_fallthru
      _
    // Predicated region
    $region54: #{tpu_custom_call.1} parent=1 // pred_check
      _
    $region55: #{tpu_custom_call.1} parent=1 // pred_check_branch
      %108 = sbr.rel (0) target = $region57
    $region56: #{tpu_custom_call.1} parent=1 // pred_region
      %109 = dma.done [#allocation12], 2048
    $region57: #{tpu_custom_call.1} parent=1 // pred_fallthru
      _
    %v111 = vld [vmem:[#allocation2] sm:$0xff]
    %v112 = vld [vmem:[#allocation2 + $0x8] sm:$0xff]
    %v113 = vld [vmem:[#allocation2 + $0x10] sm:$0xff]
    %v114 = vld [vmem:[#allocation2 + $0x18] sm:$0xff]
    %v115 = vld [vmem:[#allocation2 + $0x20] sm:$0xff]
    %v116 = vld [vmem:[#allocation2 + $0x28] sm:$0xff]
    %v117 = vld [vmem:[#allocation7] sm:$0xff]
    %v118 = vld [vmem:[#allocation7 + $0x8] sm:$0xff]
    %v119 = vld [vmem:[#allocation7 + $0x10] sm:$0xff]
    %v120 = vld [vmem:[#allocation7 + $0x18] sm:$0xff]
    %v121 = vld [vmem:[#allocation7 + $0x20] sm:$0xff]
    %v122 = vld [vmem:[#allocation7 + $0x28] sm:$0xff]
    %v123 = vld [vmem:[#allocation7 + $0x30] sm:$0xff]
    %v124 = vld [vmem:[#allocation7 + $0x38] sm:$0xff]
    %v125 = vld [vmem:[#allocation7 + $0x40] sm:$0xff]
    %v126 = vld [vmem:[#allocation7 + $0x48] sm:$0xff]
    %v127 = vld [vmem:[#allocation7 + $0x50] sm:$0xff]
    %v128 = vld [vmem:[#allocation7 + $0x58] sm:$0xff]
    %v129 = vld [vmem:[#allocation7 + $0x60] sm:$0xff]
    %v130 = vld [vmem:[#allocation7 + $0x68] sm:$0xff]
    %v131 = vld [vmem:[#allocation7 + $0x70] sm:$0xff]
    %v132 = vld [vmem:[#allocation7 + $0x78] sm:$0xff]
    %v133 = vld [vmem:[#allocation7 + $0x80] sm:$0xff]
    %v134 = vld [vmem:[#allocation7 + $0x88] sm:$0xff]
    %v135 = vld [vmem:[#allocation7 + $0x90] sm:$0xff]
    %v136 = vld [vmem:[#allocation7 + $0x98] sm:$0xff]
    %v137 = vld [vmem:[#allocation7 + $0xa0] sm:$0xff]
    %v138 = vld [vmem:[#allocation7 + $0xa8] sm:$0xff]
    %v139 = vld [vmem:[#allocation7 + $0xb0] sm:$0xff]
    %v140 = vld [vmem:[#allocation7 + $0xb8] sm:$0xff]
    %v141 = vld [vmem:[#allocation7 + $0xc0] sm:$0xff]
    %v142 = vld [vmem:[#allocation7 + $0xc8] sm:$0xff]
    %v143 = vld [vmem:[#allocation7 + $0xd0] sm:$0xff]
    %v144 = vld [vmem:[#allocation7 + $0xd8] sm:$0xff]
    %v145 = vld [vmem:[#allocation7 + $0xe0] sm:$0xff]
    %v146 = vld [vmem:[#allocation7 + $0xe8] sm:$0xff]
    %v147 = vld [vmem:[#allocation7 + $0xf0] sm:$0xff]
    %v148 = vld [vmem:[#allocation7 + $0xf8] sm:$0xff]
    %v155 = vunpack.c.l.b16 %v111
    %v156 = vunpack.c.h.b16 %v111
    %v157 = vunpack.c.l.b16 %v112
    %v158 = vunpack.c.h.b16 %v112
    %v159 = vunpack.c.l.b16 %v113
    %v160 = vunpack.c.h.b16 %v113
    %v161 = vunpack.c.l.b16 %v114
    %v162 = vunpack.c.h.b16 %v114
    %v163 = vunpack.c.l.b16 %v115
    %v164 = vunpack.c.h.b16 %v115
    %v165 = vunpack.c.l.b16 %v116
    %v166 = vunpack.c.h.b16 %v116
    %v167 = vpack.c.b16 %v157, %v155
    %v168 = vpack.c.b16 %v158, %v156
    %v169 = vpack.c.b16 %v161, %v159
    %v170 = vpack.c.b16 %v162, %v160
    %v171 = vpack.c.b16 %v165, %v163
    %v172 = vpack.c.b16 %v166, %v164
    %v211 = vunpack.c.l.b16 %v117
    %v212 = vunpack.c.h.b16 %v117
    %v213 = vunpack.c.l.b16 %v118
    %v214 = vunpack.c.h.b16 %v118
    %v215 = vunpack.c.l.b16 %v119
    %v216 = vunpack.c.h.b16 %v119
    %v217 = vunpack.c.l.b16 %v120
    %v218 = vunpack.c.h.b16 %v120
    %v219 = vunpack.c.l.b16 %v121
    %v220 = vunpack.c.h.b16 %v121
    %v221 = vunpack.c.l.b16 %v122
    %v222 = vunpack.c.h.b16 %v122
    %v223 = vunpack.c.l.b16 %v123
    %v224 = vunpack.c.h.b16 %v123
    %v225 = vunpack.c.l.b16 %v124
    %v226 = vunpack.c.h.b16 %v124
    %v227 = vunpack.c.l.b16 %v125
    %v228 = vunpack.c.h.b16 %v125
    %v229 = vunpack.c.l.b16 %v126
    %v230 = vunpack.c.h.b16 %v126
    %v231 = vunpack.c.l.b16 %v127
    %v232 = vunpack.c.h.b16 %v127
    %v233 = vunpack.c.l.b16 %v128
    %v234 = vunpack.c.h.b16 %v128
    %v235 = vunpack.c.l.b16 %v129
    %v236 = vunpack.c.h.b16 %v129
    %v237 = vunpack.c.l.b16 %v130
    %v238 = vunpack.c.h.b16 %v130
    %v239 = vunpack.c.l.b16 %v131
    %v240 = vunpack.c.h.b16 %v131
    %v241 = vunpack.c.l.b16 %v132
    %v242 = vunpack.c.h.b16 %v132
    %v243 = vunpack.c.l.b16 %v133
    %v244 = vunpack.c.h.b16 %v133
    %v245 = vunpack.c.l.b16 %v134
    %v246 = vunpack.c.h.b16 %v134
    %v247 = vunpack.c.l.b16 %v135
    %v248 = vunpack.c.h.b16 %v135
    %v249 = vunpack.c.l.b16 %v136
    %v250 = vunpack.c.h.b16 %v136
    %v251 = vunpack.c.l.b16 %v137
    %v252 = vunpack.c.h.b16 %v137
    %v253 = vunpack.c.l.b16 %v138
    %v254 = vunpack.c.h.b16 %v138
    %v255 = vunpack.c.l.b16 %v139
    %v256 = vunpack.c.h.b16 %v139
    %v257 = vunpack.c.l.b16 %v140
    %v258 = vunpack.c.h.b16 %v140
    %v259 = vunpack.c.l.b16 %v141
    %v260 = vunpack.c.h.b16 %v141
    %v261 = vunpack.c.l.b16 %v142
    %v262 = vunpack.c.h.b16 %v142
    %v263 = vunpack.c.l.b16 %v143
    %v264 = vunpack.c.h.b16 %v143
    %v265 = vunpack.c.l.b16 %v144
    %v266 = vunpack.c.h.b16 %v144
    %v267 = vunpack.c.l.b16 %v145
    %v268 = vunpack.c.h.b16 %v145
    %v269 = vunpack.c.l.b16 %v146
    %v270 = vunpack.c.h.b16 %v146
    %v271 = vunpack.c.l.b16 %v147
    %v272 = vunpack.c.h.b16 %v147
    %v273 = vunpack.c.l.b16 %v148
    %v274 = vunpack.c.h.b16 %v148
    %v275 = vpack.c.b16 %v213, %v211
    %v276 = vpack.c.b16 %v214, %v212
    %v277 = vpack.c.b16 %v217, %v215
    %v278 = vpack.c.b16 %v218, %v216
    %v279 = vpack.c.b16 %v221, %v219
    %v280 = vpack.c.b16 %v222, %v220
    %v281 = vpack.c.b16 %v225, %v223
    %v282 = vpack.c.b16 %v226, %v224
    %v283 = vpack.c.b16 %v229, %v227
    %v284 = vpack.c.b16 %v230, %v228
    %v285 = vpack.c.b16 %v233, %v231
    %v286 = vpack.c.b16 %v234, %v232
    %v287 = vpack.c.b16 %v237, %v235
    %v288 = vpack.c.b16 %v238, %v236
    %v289 = vpack.c.b16 %v241, %v239
    %v290 = vpack.c.b16 %v242, %v240
    %v291 = vpack.c.b16 %v245, %v243
    %v292 = vpack.c.b16 %v246, %v244
    %v293 = vpack.c.b16 %v249, %v247
    %v294 = vpack.c.b16 %v250, %v248
    %v295 = vpack.c.b16 %v253, %v251
    %v296 = vpack.c.b16 %v254, %v252
    %v297 = vpack.c.b16 %v257, %v255
    %v298 = vpack.c.b16 %v258, %v256
    %v299 = vpack.c.b16 %v261, %v259
    %v300 = vpack.c.b16 %v262, %v260
    %v301 = vpack.c.b16 %v265, %v263
    %v302 = vpack.c.b16 %v266, %v264
    %v303 = vpack.c.b16 %v269, %v267
    %v304 = vpack.c.b16 %v270, %v268
    %v305 = vpack.c.b16 %v273, %v271
    %v306 = vpack.c.b16 %v274, %v272
    %339 = vmatprep.subr.bf16.mxu0 %v276
    %340 = vmatpush1.bf16.msra.mxu0 %v275
    %341 = vmatprep.subr.bf16.mxu0 %v278
    %342 = vmatpush1.bf16.msra.mxu0 %v277
    %343 = vmatprep.subr.bf16.mxu0 %v280
    %344 = vmatpush1.bf16.msra.mxu0 %v279
    %345 = vmatprep.subr.bf16.mxu0 %v282
    %346 = vmatpush1.bf16.msra.mxu0 %v281
    %347 = vmatprep.subr.bf16.mxu0 %v284
    %348 = vmatpush1.bf16.msra.mxu0 %v283
    %349 = vmatprep.subr.bf16.mxu0 %v286
    %350 = vmatpush1.bf16.msra.mxu0 %v285
    %351 = vmatprep.subr.bf16.mxu0 %v288
    %352 = vmatpush1.bf16.msra.mxu0 %v287
    %353 = vmatprep.subr.bf16.mxu0 %v290
    %354 = vmatpush1.bf16.msra.mxu0 %v289
    %355 = vmatprep.subr.bf16.mxu0 %v292
    %356 = vmatpush1.bf16.msra.mxu0 %v291
    %357 = vmatprep.subr.bf16.mxu0 %v294
    %358 = vmatpush1.bf16.msra.mxu0 %v293
    %359 = vmatprep.subr.bf16.mxu0 %v296
    %360 = vmatpush1.bf16.msra.mxu0 %v295
    %361 = vmatprep.subr.bf16.mxu0 %v298
    %362 = vmatpush1.bf16.msra.mxu0 %v297
    %363 = vmatprep.subr.bf16.mxu0 %v300
    %364 = vmatpush1.bf16.msra.mxu0 %v299
    %365 = vmatprep.subr.bf16.mxu0 %v302
    %366 = vmatpush1.bf16.msra.mxu0 %v301
    %367 = vmatprep.subr.bf16.mxu0 %v304
    %368 = vmatpush1.bf16.msra.mxu0 %v303
    %369 = vmatprep.subr.bf16.mxu0 %v306
    %370 = vmatpush1.bf16.msra.mxu0 %v305
    %371 = vmatprep.mubr.bf16.mxu0 %v168
    %372 = vmatmul.mubr.bf16.gmra.mrb[0].mxu0 %v167
    %v373 = vpop.f32.mrb[0].mxu0
    %v374 = vadd.f32 0.0, %v373
    %v375 = vpop.f32.mrb[0].mxu0
    %v376 = vadd.f32 0.0, %v375
    %v377 = vpop.f32.mrb[0].mxu0
    %v378 = vadd.f32 0.0, %v377
    %v379 = vpop.f32.mrb[0].mxu0
    %v380 = vadd.f32 0.0, %v379
    %381 = vmatprep.mubr.bf16.mxu0 %v170
    %382 = vmatmul.mubr.bf16.gmra.mrb[0].mxu0 %v169
    %v383 = vpop.f32.mrb[0].mxu0
    %v384 = vadd.f32 0.0, %v383
    %v385 = vpop.f32.mrb[0].mxu0
    %v386 = vadd.f32 0.0, %v385
    %v387 = vpop.f32.mrb[0].mxu0
    %v388 = vadd.f32 0.0, %v387
    %v389 = vpop.f32.mrb[0].mxu0
    %v390 = vadd.f32 0.0, %v389
    %391 = vmatprep.mubr.bf16.mxu0 %v172
    %392 = vmatmul.mubr.bf16.gmra.mrb[0].mxu0 %v171
    %v393 = vpop.f32.mrb[0].mxu0
    %v394 = vadd.f32 0.0, %v393
    %v395 = vpop.f32.mrb[0].mxu0
    %v396 = vadd.f32 0.0, %v395
    %v397 = vpop.f32.mrb[0].mxu0
    %v398 = vadd.f32 0.0, %v397
    %v399 = vpop.f32.mrb[0].mxu0
    %v400 = vadd.f32 0.0, %v399
    %401 = vdwg.mxu0
    %v402 = vmax.f32 %v374, 0.0
    %v403 = vmax.f32 %v376, 0.0
    %v404 = vmax.f32 %v378, 0.0
    %v405 = vmax.f32 %v380, 0.0
    %v406 = vmax.f32 %v384, 0.0
    %v407 = vmax.f32 %v386, 0.0
    %v408 = vmax.f32 %v388, 0.0
    %v409 = vmax.f32 %v390, 0.0
    %v410 = vmax.f32 %v394, 0.0
    %v411 = vmax.f32 %v396, 0.0
    %v412 = vmax.f32 %v398, 0.0
    %v413 = vmax.f32 %v400, 0.0
    %v414 = vpack.c.bf16 %v404, %v402
    %v415 = vpack.c.bf16 %v405, %v403
    %v416 = vpack.c.bf16 %v408, %v406
    %v417 = vpack.c.bf16 %v409, %v407
    %v418 = vpack.c.bf16 %v412, %v410
    %v419 = vpack.c.bf16 %v413, %v411
    %v420 = vld [vmem:[#allocation8] sm:$0xf]
    %v421 = vld [vmem:[#allocation8 + $0x4] sm:$0xf]
    %v422 = vld [vmem:[#allocation8 + $0x8] sm:$0xf]
    %v423 = vld [vmem:[#allocation8 + $0xc] sm:$0xf]
    %v424 = vld [vmem:[#allocation8 + $0x10] sm:$0xf]
    %v425 = vld [vmem:[#allocation8 + $0x14] sm:$0xf]
    %v426 = vld [vmem:[#allocation8 + $0x18] sm:$0xf]
    %v427 = vld [vmem:[#allocation8 + $0x1c] sm:$0xf]
    %v428 = vld [vmem:[#allocation8 + $0x20] sm:$0xf]
    %v429 = vld [vmem:[#allocation8 + $0x24] sm:$0xf]
    %v430 = vld [vmem:[#allocation8 + $0x28] sm:$0xf]
    %v431 = vld [vmem:[#allocation8 + $0x2c] sm:$0xf]
    %v432 = vld [vmem:[#allocation8 + $0x30] sm:$0xf]
    %v433 = vld [vmem:[#allocation8 + $0x34] sm:$0xf]
    %v434 = vld [vmem:[#allocation8 + $0x38] sm:$0xf]
    %v435 = vld [vmem:[#allocation8 + $0x3c] sm:$0xf]
    %v436 = vld [vmem:[#allocation8 + $0x40] sm:$0xf]
    %v437 = vld [vmem:[#allocation8 + $0x44] sm:$0xf]
    %v438 = vld [vmem:[#allocation8 + $0x48] sm:$0xf]
    %v439 = vld [vmem:[#allocation8 + $0x4c] sm:$0xf]
    %v440 = vld [vmem:[#allocation8 + $0x50] sm:$0xf]
    %v441 = vld [vmem:[#allocation8 + $0x54] sm:$0xf]
    %v442 = vld [vmem:[#allocation8 + $0x58] sm:$0xf]
    %v443 = vld [vmem:[#allocation8 + $0x5c] sm:$0xf]
    %v444 = vld [vmem:[#allocation8 + $0x60] sm:$0xf]
    %v445 = vld [vmem:[#allocation8 + $0x64] sm:$0xf]
    %v446 = vld [vmem:[#allocation8 + $0x68] sm:$0xf]
    %v447 = vld [vmem:[#allocation8 + $0x6c] sm:$0xf]
    %v448 = vld [vmem:[#allocation8 + $0x70] sm:$0xf]
    %v449 = vld [vmem:[#allocation8 + $0x74] sm:$0xf]
    %v450 = vld [vmem:[#allocation8 + $0x78] sm:$0xf]
    %v451 = vld [vmem:[#allocation8 + $0x7c] sm:$0xf]
    %v484 = vunpack.c.l.b16 %v420
    %v485 = vunpack.c.l.b16 %v421
    %v486 = vunpack.c.l.b16 %v422
    %v487 = vunpack.c.l.b16 %v423
    %v488 = vunpack.c.l.b16 %v424
    %v489 = vunpack.c.l.b16 %v425
    %v490 = vunpack.c.l.b16 %v426
    %v491 = vunpack.c.l.b16 %v427
    %v492 = vunpack.c.l.b16 %v428
    %v493 = vunpack.c.l.b16 %v429
    %v494 = vunpack.c.l.b16 %v430
    %v495 = vunpack.c.l.b16 %v431
    %v496 = vunpack.c.l.b16 %v432
    %v497 = vunpack.c.l.b16 %v433
    %v498 = vunpack.c.l.b16 %v434
    %v499 = vunpack.c.l.b16 %v435
    %v500 = vunpack.c.l.b16 %v436
    %v501 = vunpack.c.l.b16 %v437
    %v502 = vunpack.c.l.b16 %v438
    %v503 = vunpack.c.l.b16 %v439
    %v504 = vunpack.c.l.b16 %v440
    %v505 = vunpack.c.l.b16 %v441
    %v506 = vunpack.c.l.b16 %v442
    %v507 = vunpack.c.l.b16 %v443
    %v508 = vunpack.c.l.b16 %v444
    %v509 = vunpack.c.l.b16 %v445
    %v510 = vunpack.c.l.b16 %v446
    %v511 = vunpack.c.l.b16 %v447
    %v512 = vunpack.c.l.b16 %v448
    %v513 = vunpack.c.l.b16 %v449
    %v514 = vunpack.c.l.b16 %v450
    %v515 = vunpack.c.l.b16 %v451
    %v516 = vpack.c.b16 %v485, %v484
    %v517 = vpack.c.b16 %v487, %v486
    %v518 = vpack.c.b16 %v489, %v488
    %v519 = vpack.c.b16 %v491, %v490
    %v520 = vpack.c.b16 %v493, %v492
    %v521 = vpack.c.b16 %v495, %v494
    %v522 = vpack.c.b16 %v497, %v496
    %v523 = vpack.c.b16 %v499, %v498
    %v524 = vpack.c.b16 %v501, %v500
    %v525 = vpack.c.b16 %v503, %v502
    %v526 = vpack.c.b16 %v505, %v504
    %v527 = vpack.c.b16 %v507, %v506
    %v528 = vpack.c.b16 %v509, %v508
    %v529 = vpack.c.b16 %v511, %v510
    %v530 = vpack.c.b16 %v513, %v512
    %v531 = vpack.c.b16 %v515, %v514
    %548 = vmatprep.subr.bf16.mxu0 0
    %549 = vmatpush1.bf16.msra.mxu0 %v516
    %550 = vmatprep.subr.bf16.mxu0 0
    %551 = vmatpush1.bf16.msra.mxu0 %v517
    %552 = vmatprep.subr.bf16.mxu0 0
    %553 = vmatpush1.bf16.msra.mxu0 %v518
    %554 = vmatprep.subr.bf16.mxu0 0
    %555 = vmatpush1.bf16.msra.mxu0 %v519
    %556 = vmatprep.subr.bf16.mxu0 0
    %557 = vmatpush1.bf16.msra.mxu0 %v520
    %558 = vmatprep.subr.bf16.mxu0 0
    %559 = vmatpush1.bf16.msra.mxu0 %v521
    %560 = vmatprep.subr.bf16.mxu0 0
    %561 = vmatpush1.bf16.msra.mxu0 %v522
    %562 = vmatprep.subr.bf16.mxu0 0
    %563 = vmatpush1.bf16.msra.mxu0 %v523
    %564 = vmatprep.subr.bf16.mxu0 0
    %565 = vmatpush1.bf16.msra.mxu0 %v524
    %566 = vmatprep.subr.bf16.mxu0 0
    %567 = vmatpush1.bf16.msra.mxu0 %v525
    %568 = vmatprep.subr.bf16.mxu0 0
    %569 = vmatpush1.bf16.msra.mxu0 %v526
    %570 = vmatprep.subr.bf16.mxu0 0
    %571 = vmatpush1.bf16.msra.mxu0 %v527
    %572 = vmatprep.subr.bf16.mxu0 0
    %573 = vmatpush1.bf16.msra.mxu0 %v528
    %574 = vmatprep.subr.bf16.mxu0 0
    %575 = vmatpush1.bf16.msra.mxu0 %v529
    %576 = vmatprep.subr.bf16.mxu0 0
    %577 = vmatpush1.bf16.msra.mxu0 %v530
    %578 = vmatprep.subr.bf16.mxu0 0
    %579 = vmatpush1.bf16.msra.mxu0 %v531
    %580 = vmatprep.mubr.bf16.mxu0 %v415
    %581 = vmatmul.mubr.bf16.gmra.mrb[0].mxu0 %v414
    %v582 = vpop.f32.mrb[0].mxu0
    %v583 = vadd.f32 0.0, %v582
    %v584 = vpop.f32.mrb[0].mxu0
    %v585 = vpop.f32.mrb[0].mxu0
    %v586 = vadd.f32 0.0, %v585
    %v587 = vpop.f32.mrb[0].mxu0
    %588 = vmatprep.mubr.bf16.mxu0 %v417
    %589 = vmatmul.mubr.bf16.gmra.mrb[0].mxu0 %v416
    %v590 = vpop.f32.mrb[0].mxu0
    %v591 = vadd.f32 0.0, %v590
    %v592 = vpop.f32.mrb[0].mxu0
    %v593 = vpop.f32.mrb[0].mxu0
    %v594 = vadd.f32 0.0, %v593
    %v595 = vpop.f32.mrb[0].mxu0
    %596 = vmatprep.mubr.bf16.mxu0 %v419
    %597 = vmatmul.mubr.bf16.gmra.mrb[0].mxu0 %v418
    %v598 = vpop.f32.mrb[0].mxu0
    %v599 = vadd.f32 0.0, %v598
    %v600 = vpop.f32.mrb[0].mxu0
    %v601 = vpop.f32.mrb[0].mxu0
    %v602 = vadd.f32 0.0, %v601
    %v603 = vpop.f32.mrb[0].mxu0
    %604 = vdwg.mxu0
    %v605 = vmax.f32 %v583, 0.0
    %v606 = vmax.f32 %v586, 0.0
    %v607 = vmax.f32 %v591, 0.0
    %v608 = vmax.f32 %v594, 0.0
    %v609 = vmax.f32 %v599, 0.0
    %v610 = vmax.f32 %v602, 0.0
    %v611 = vpack.c.bf16 %v606, %v605
    %v612 = vpack.c.bf16 %v608, %v607
    %v613 = vpack.c.bf16 %v610, %v609
    %v614 = vld [vmem:[#allocation10] sm:$0xf]
    %v615 = vld [vmem:[#allocation10 + $0x4] sm:$0xf]
    %v616 = vld [vmem:[#allocation10 + $0x8] sm:$0xf]
    %v617 = vld [vmem:[#allocation10 + $0xc] sm:$0xf]
    %v618 = vld [vmem:[#allocation10 + $0x10] sm:$0xf]
    %v619 = vld [vmem:[#allocation10 + $0x14] sm:$0xf]
    %v620 = vld [vmem:[#allocation10 + $0x18] sm:$0xf]
    %v621 = vld [vmem:[#allocation10 + $0x1c] sm:$0xf]
    %v622 = vld [vmem:[#allocation10 + $0x20] sm:$0xf]
    %v623 = vld [vmem:[#allocation10 + $0x24] sm:$0xf]
    %v624 = vld [vmem:[#allocation10 + $0x28] sm:$0xf]
    %v625 = vld [vmem:[#allocation10 + $0x2c] sm:$0xf]
    %v626 = vld [vmem:[#allocation10 + $0x30] sm:$0xf]
    %v627 = vld [vmem:[#allocation10 + $0x34] sm:$0xf]
    %v628 = vld [vmem:[#allocation10 + $0x38] sm:$0xf]
    %v629 = vld [vmem:[#allocation10 + $0x3c] sm:$0xf]
    %v646 = vunpack.c.l.b16 %v614
    %v647 = vunpack.c.l.b16 %v615
    %v648 = vunpack.c.l.b16 %v616
    %v649 = vunpack.c.l.b16 %v617
    %v650 = vunpack.c.l.b16 %v618
    %v651 = vunpack.c.l.b16 %v619
    %v652 = vunpack.c.l.b16 %v620
    %v653 = vunpack.c.l.b16 %v621
    %v654 = vunpack.c.l.b16 %v622
    %v655 = vunpack.c.l.b16 %v623
    %v656 = vunpack.c.l.b16 %v624
    %v657 = vunpack.c.l.b16 %v625
    %v658 = vunpack.c.l.b16 %v626
    %v659 = vunpack.c.l.b16 %v627
    %v660 = vunpack.c.l.b16 %v628
    %v661 = vunpack.c.l.b16 %v629
    %v662 = vpack.c.b16 %v647, %v646
    %v663 = vpack.c.b16 %v649, %v648
    %v664 = vpack.c.b16 %v651, %v650
    %v665 = vpack.c.b16 %v653, %v652
    %v666 = vpack.c.b16 %v655, %v654
    %v667 = vpack.c.b16 %v657, %v656
    %v668 = vpack.c.b16 %v659, %v658
    %v669 = vpack.c.b16 %v661, %v660
    %678 = vmatprep.subr.bf16.mxu0 0
    %679 = vmatpush1.bf16.msra.mxu0 %v662
    %680 = vmatprep.subr.bf16.mxu0 0
    %681 = vmatpush1.bf16.msra.mxu0 %v663
    %682 = vmatprep.subr.bf16.mxu0 0
    %683 = vmatpush1.bf16.msra.mxu0 %v664
    %684 = vmatprep.subr.bf16.mxu0 0
    %685 = vmatpush1.bf16.msra.mxu0 %v665
    %686 = vmatprep.subr.bf16.mxu0 0
    %687 = vmatpush1.bf16.msra.mxu0 %v666
    %688 = vmatprep.subr.bf16.mxu0 0
    %689 = vmatpush1.bf16.msra.mxu0 %v667
    %690 = vmatprep.subr.bf16.mxu0 0
    %691 = vmatpush1.bf16.msra.mxu0 %v668
    %692 = vmatprep.subr.bf16.mxu0 0
    %693 = vmatpush1.bf16.msra.mxu0 %v669
    %694 = vmatprep.subr.bf16.mxu0 0
    %695 = vmatpush1.bf16.msra.mxu0 0
    %696 = vmatprep.subr.bf16.mxu0 0
    %697 = vmatpush1.bf16.msra.mxu0 0
    %698 = vmatprep.subr.bf16.mxu0 0
    %699 = vmatpush1.bf16.msra.mxu0 0
    %700 = vmatprep.subr.bf16.mxu0 0
    %701 = vmatpush1.bf16.msra.mxu0 0
    %702 = vmatprep.subr.bf16.mxu0 0
    %703 = vmatpush1.bf16.msra.mxu0 0
    %704 = vmatprep.subr.bf16.mxu0 0
    %705 = vmatpush1.bf16.msra.mxu0 0
    %706 = vmatprep.subr.bf16.mxu0 0
    %707 = vmatpush1.bf16.msra.mxu0 0
    %708 = vmatprep.subr.bf16.mxu0 0
    %709 = vmatpush1.bf16.msra.mxu0 0
    %710 = vmatprep.mubr.bf16.mxu0 0
    %711 = vmatmul.mubr.bf16.gmra.mrb[0].mxu0 %v611
    %v712 = vpop.f32.mrb[0].mxu0
    %v713 = vadd.f32 0.0, %v712
    %v714 = vpop.f32.mrb[0].mxu0
    %v715 = vpop.f32.mrb[0].mxu0
    %v716 = vadd.f32 0.0, %v715
    %v717 = vpop.f32.mrb[0].mxu0
    %718 = vmatprep.mubr.bf16.mxu0 0
    %719 = vmatmul.mubr.bf16.gmra.mrb[0].mxu0 %v612
    %v720 = vpop.f32.mrb[0].mxu0
    %v721 = vadd.f32 0.0, %v720
    %v722 = vpop.f32.mrb[0].mxu0
    %v723 = vpop.f32.mrb[0].mxu0
    %v724 = vadd.f32 0.0, %v723
    %v725 = vpop.f32.mrb[0].mxu0
    %726 = vmatprep.mubr.bf16.mxu0 0
    %727 = vmatmul.mubr.bf16.gmra.mrb[0].mxu0 %v613
    %v728 = vpop.f32.mrb[0].mxu0
    %v729 = vadd.f32 0.0, %v728
    %v730 = vpop.f32.mrb[0].mxu0
    %v731 = vpop.f32.mrb[0].mxu0
    %v732 = vadd.f32 0.0, %v731
    %v733 = vpop.f32.mrb[0].mxu0
    %734 = vdwg.mxu0
    %v735 = vld [vmem:[#allocation11] sm:$0xf]
    %v736 = vld [vmem:[#allocation11 + $0x4] sm:$0xf]
    %v737 = vld [vmem:[#allocation11 + $0x8] sm:$0xf]
    %v738 = vld [vmem:[#allocation11 + $0xc] sm:$0xf]
    %v739 = vld [vmem:[#allocation11 + $0x10] sm:$0xf]
    %v740 = vld [vmem:[#allocation11 + $0x14] sm:$0xf]
    %v741 = vld [vmem:[#allocation11 + $0x18] sm:$0xf]
    %v742 = vld [vmem:[#allocation11 + $0x1c] sm:$0xf]
    %v743 = vld [vmem:[#allocation11 + $0x20] sm:$0xf]
    %v744 = vld [vmem:[#allocation11 + $0x24] sm:$0xf]
    %v745 = vld [vmem:[#allocation11 + $0x28] sm:$0xf]
    %v746 = vld [vmem:[#allocation11 + $0x2c] sm:$0xf]
    %v747 = vld [vmem:[#allocation11 + $0x30] sm:$0xf]
    %v748 = vld [vmem:[#allocation11 + $0x34] sm:$0xf]
    %v749 = vld [vmem:[#allocation11 + $0x38] sm:$0xf]
    %v750 = vld [vmem:[#allocation11 + $0x3c] sm:$0xf]
    %v767 = vunpack.c.l.b16 %v735
    %v768 = vunpack.c.l.b16 %v736
    %v769 = vunpack.c.l.b16 %v737
    %v770 = vunpack.c.l.b16 %v738
    %v771 = vunpack.c.l.b16 %v739
    %v772 = vunpack.c.l.b16 %v740
    %v773 = vunpack.c.l.b16 %v741
    %v774 = vunpack.c.l.b16 %v742
    %v775 = vunpack.c.l.b16 %v743
    %v776 = vunpack.c.l.b16 %v744
    %v777 = vunpack.c.l.b16 %v745
    %v778 = vunpack.c.l.b16 %v746
    %v779 = vunpack.c.l.b16 %v747
    %v780 = vunpack.c.l.b16 %v748
    %v781 = vunpack.c.l.b16 %v749
    %v782 = vunpack.c.l.b16 %v750
    %v783 = vpack.c.b16 %v768, %v767
    %v784 = vpack.c.b16 %v770, %v769
    %v785 = vpack.c.b16 %v772, %v771
    %v786 = vpack.c.b16 %v774, %v773
    %v787 = vpack.c.b16 %v776, %v775
    %v788 = vpack.c.b16 %v778, %v777
    %v789 = vpack.c.b16 %v780, %v779
    %v790 = vpack.c.b16 %v782, %v781
    %799 = vmatprep.subr.bf16.mxu0 0
    %800 = vmatpush1.bf16.msra.mxu0 %v783
    %801 = vmatprep.subr.bf16.mxu0 0
    %802 = vmatpush1.bf16.msra.mxu0 %v784
    %803 = vmatprep.subr.bf16.mxu0 0
    %804 = vmatpush1.bf16.msra.mxu0 %v785
    %805 = vmatprep.subr.bf16.mxu0 0
    %806 = vmatpush1.bf16.msra.mxu0 %v786
    %807 = vmatprep.subr.bf16.mxu0 0
    %808 = vmatpush1.bf16.msra.mxu0 %v787
    %809 = vmatprep.subr.bf16.mxu0 0
    %810 = vmatpush1.bf16.msra.mxu0 %v788
    %811 = vmatprep.subr.bf16.mxu0 0
    %812 = vmatpush1.bf16.msra.mxu0 %v789
    %813 = vmatprep.subr.bf16.mxu0 0
    %814 = vmatpush1.bf16.msra.mxu0 %v790
    %815 = vmatprep.subr.bf16.mxu0 0
    %816 = vmatpush1.bf16.msra.mxu0 0
    %817 = vmatprep.subr.bf16.mxu0 0
    %818 = vmatpush1.bf16.msra.mxu0 0
    %819 = vmatprep.subr.bf16.mxu0 0
    %820 = vmatpush1.bf16.msra.mxu0 0
    %821 = vmatprep.subr.bf16.mxu0 0
    %822 = vmatpush1.bf16.msra.mxu0 0
    %823 = vmatprep.subr.bf16.mxu0 0
    %824 = vmatpush1.bf16.msra.mxu0 0
    %825 = vmatprep.subr.bf16.mxu0 0
    %826 = vmatpush1.bf16.msra.mxu0 0
    %827 = vmatprep.subr.bf16.mxu0 0
    %828 = vmatpush1.bf16.msra.mxu0 0
    %829 = vmatprep.subr.bf16.mxu0 0
    %830 = vmatpush1.bf16.msra.mxu0 0
    %831 = vmatprep.mubr.bf16.mxu0 0
    %832 = vmatmul.mubr.bf16.gmra.mrb[0].mxu0 %v611
    %v833 = vpop.f32.mrb[0].mxu0
    %v834 = vadd.f32 0.0, %v833
    %v835 = vpop.f32.mrb[0].mxu0
    %v836 = vpop.f32.mrb[0].mxu0
    %v837 = vadd.f32 0.0, %v836
    %v838 = vpop.f32.mrb[0].mxu0
    %839 = vmatprep.mubr.bf16.mxu0 0
    %840 = vmatmul.mubr.bf16.gmra.mrb[0].mxu0 %v612
    %v841 = vpop.f32.mrb[0].mxu0
    %v842 = vadd.f32 0.0, %v841
    %v843 = vpop.f32.mrb[0].mxu0
    %v844 = vpop.f32.mrb[0].mxu0
    %v845 = vadd.f32 0.0, %v844
    %v846 = vpop.f32.mrb[0].mxu0
    %847 = vmatprep.mubr.bf16.mxu0 0
    %848 = vmatmul.mubr.bf16.gmra.mrb[0].mxu0 %v613
    %v849 = vpop.f32.mrb[0].mxu0
    %v850 = vadd.f32 0.0, %v849
    %v851 = vpop.f32.mrb[0].mxu0
    %v852 = vpop.f32.mrb[0].mxu0
    %v853 = vadd.f32 0.0, %v852
    %v854 = vpop.f32.mrb[0].mxu0
    %855 = vdwg.mxu0
    %v856 = vadd.f32 %v713, %v853
    %v857 = vadd.f32 %v716, %v834
    %v858 = vadd.f32 %v721, %v837
    %v859 = vadd.f32 %v724, %v842
    %v860 = vadd.f32 %v729, %v845
    %v861 = vadd.f32 %v732, %v850
    %s862 = scalar_lea.vmem [#allocation11], 64
    %v863 = vld [vmem:[%s862] sm:$0xf]
    %v864 = vld [vmem:[%s862 + $0x4] sm:$0xf]
    %v865 = vld [vmem:[%s862 + $0x8] sm:$0xf]
    %v866 = vld [vmem:[%s862 + $0xc] sm:$0xf]
    %v867 = vld [vmem:[%s862 + $0x10] sm:$0xf]
    %v868 = vld [vmem:[%s862 + $0x14] sm:$0xf]
    %v869 = vld [vmem:[%s862 + $0x18] sm:$0xf]
    %v870 = vld [vmem:[%s862 + $0x1c] sm:$0xf]
    %v871 = vld [vmem:[%s862 + $0x20] sm:$0xf]
    %v872 = vld [vmem:[%s862 + $0x24] sm:$0xf]
    %v873 = vld [vmem:[%s862 + $0x28] sm:$0xf]
    %v874 = vld [vmem:[%s862 + $0x2c] sm:$0xf]
    %v875 = vld [vmem:[%s862 + $0x30] sm:$0xf]
    %v876 = vld [vmem:[%s862 + $0x34] sm:$0xf]
    %v877 = vld [vmem:[%s862 + $0x38] sm:$0xf]
    %v878 = vld [vmem:[%s862 + $0x3c] sm:$0xf]
    %v895 = vunpack.c.l.b16 %v863
    %v896 = vunpack.c.l.b16 %v864
    %v897 = vunpack.c.l.b16 %v865
    %v898 = vunpack.c.l.b16 %v866
    %v899 = vunpack.c.l.b16 %v867
    %v900 = vunpack.c.l.b16 %v868
    %v901 = vunpack.c.l.b16 %v869
    %v902 = vunpack.c.l.b16 %v870
    %v903 = vunpack.c.l.b16 %v871
    %v904 = vunpack.c.l.b16 %v872
    %v905 = vunpack.c.l.b16 %v873
    %v906 = vunpack.c.l.b16 %v874
    %v907 = vunpack.c.l.b16 %v875
    %v908 = vunpack.c.l.b16 %v876
    %v909 = vunpack.c.l.b16 %v877
    %v910 = vunpack.c.l.b16 %v878
    %v911 = vpack.c.b16 %v896, %v895
    %v912 = vpack.c.b16 %v898, %v897
    %v913 = vpack.c.b16 %v900, %v899
    %v914 = vpack.c.b16 %v902, %v901
    %v915 = vpack.c.b16 %v904, %v903
    %v916 = vpack.c.b16 %v906, %v905
    %v917 = vpack.c.b16 %v908, %v907
    %v918 = vpack.c.b16 %v910, %v909
    %927 = vmatprep.subr.bf16.mxu0 0
    %928 = vmatpush1.bf16.msra.mxu0 %v911
    %929 = vmatprep.subr.bf16.mxu0 0
    %930 = vmatpush1.bf16.msra.mxu0 %v912
    %931 = vmatprep.subr.bf16.mxu0 0
    %932 = vmatpush1.bf16.msra.mxu0 %v913
    %933 = vmatprep.subr.bf16.mxu0 0
    %934 = vmatpush1.bf16.msra.mxu0 %v914
    %935 = vmatprep.subr.bf16.mxu0 0
    %936 = vmatpush1.bf16.msra.mxu0 %v915
    %937 = vmatprep.subr.bf16.mxu0 0
    %938 = vmatpush1.bf16.msra.mxu0 %v916
    %939 = vmatprep.subr.bf16.mxu0 0
    %940 = vmatpush1.bf16.msra.mxu0 %v917
    %941 = vmatprep.subr.bf16.mxu0 0
    %942 = vmatpush1.bf16.msra.mxu0 %v918
    %943 = vmatprep.subr.bf16.mxu0 0
    %944 = vmatpush1.bf16.msra.mxu0 0
    %945 = vmatprep.subr.bf16.mxu0 0
    %946 = vmatpush1.bf16.msra.mxu0 0
    %947 = vmatprep.subr.bf16.mxu0 0
    %948 = vmatpush1.bf16.msra.mxu0 0
    %949 = vmatprep.subr.bf16.mxu0 0
    %950 = vmatpush1.bf16.msra.mxu0 0
    %951 = vmatprep.subr.bf16.mxu0 0
    %952 = vmatpush1.bf16.msra.mxu0 0
    %953 = vmatprep.subr.bf16.mxu0 0
    %954 = vmatpush1.bf16.msra.mxu0 0
    %955 = vmatprep.subr.bf16.mxu0 0
    %956 = vmatpush1.bf16.msra.mxu0 0
    %957 = vmatprep.subr.bf16.mxu0 0
    %958 = vmatpush1.bf16.msra.mxu0 0
    %959 = vmatprep.mubr.bf16.mxu0 0
    %960 = vmatmul.mubr.bf16.gmra.mrb[0].mxu0 %v611
    %v961 = vpop.f32.mrb[0].mxu0
    %v962 = vadd.f32 0.0, %v961
    %v963 = vpop.f32.mrb[0].mxu0
    %v964 = vpop.f32.mrb[0].mxu0
    %v965 = vadd.f32 0.0, %v964
    %v966 = vpop.f32.mrb[0].mxu0
    %967 = vmatprep.mubr.bf16.mxu0 0
    %968 = vmatmul.mubr.bf16.gmra.mrb[0].mxu0 %v612
    %v969 = vpop.f32.mrb[0].mxu0
    %v970 = vadd.f32 0.0, %v969
    %v971 = vpop.f32.mrb[0].mxu0
    %v972 = vpop.f32.mrb[0].mxu0
    %v973 = vpop.f32.mrb[0].mxu0
    %974 = vmatprep.mubr.bf16.mxu0 0
    %975 = vmatmul.mubr.bf16.gmra.mrb[0].mxu0 %v613
    %v976 = vpop.f32.mrb[0].mxu0
    %v977 = vadd.f32 0.0, %v976
    %v978 = vpop.f32.mrb[0].mxu0
    %v979 = vpop.f32.mrb[0].mxu0
    %v980 = vpop.f32.mrb[0].mxu0
    %981 = vdwg.mxu0
    %v982 = vadd.f32 %v857, %v977
    %v983 = vadd.f32 %v859, %v962
    %v984 = vadd.f32 %v860, %v965
    %v985 = vadd.f32 %v861, %v970
    %v986 = vld [vmem:[%s6] sm:$0x1]
    %v987 = vld [vmem:[%s7] sm:$0x1]
    %vm988 = vcmp.gt.f32.partialorder %v856, 0.0
    %v989 = vmul.f32 %v856, 0.01
    %v990 = vsel %vm988, %v856, %v989
    %v992 = vlaneseq
    %v993 = vshrl.u32 %v992, 7
    %v994 = vsub.s32 0, %v993
    %v995 = vrot.slane %v986, %v994
    %v997 = vmul.f32 %v605, %v995
    %998 = vadd.xlane.f32.xlu0 %v997
    %v999 = vpop.xlane.xlu0 %998
    %v1001 = vlaneseq
    %v1002 = vshrl.u32 %v1001, 7
    %v1003 = vsub.s32 0, %v1002
    %v1004 = vrot.slane %v987, %v1003
    %v1006 = vmul.f32 %v990, %v1004
    %1007 = vadd.xlane.f32.xlu0 %v1006
    %v1008 = vpop.xlane.xlu0 %1007
    %v1009 = vadd.f32 %v999, %v1008
    %vm1010 = vcmp.gt.f32.partialorder %v982, 0.0
    %v1011 = vmul.f32 %v982, 0.01
    %v1012 = vsel %vm1010, %v982, %v1011
    %v1013 = vmul.f32 %v606, %v995
    %1014 = vadd.xlane.f32.xlu0 %v1013
    %v1015 = vpop.xlane.xlu0 %1014
    %v1016 = vmul.f32 %v1012, %v1004
    %1017 = vadd.xlane.f32.xlu0 %v1016
    %v1018 = vpop.xlane.xlu0 %1017
    %v1019 = vadd.f32 %v1015, %v1018
    %vm1020 = vcmp.gt.f32.partialorder %v858, 0.0
    %v1021 = vmul.f32 %v858, 0.01
    %v1022 = vsel %vm1020, %v858, %v1021
    %v1023 = vmul.f32 %v607, %v995
    %1024 = vadd.xlane.f32.xlu0 %v1023
    %v1025 = vpop.xlane.xlu0 %1024
    %v1026 = vmul.f32 %v1022, %v1004
    %1027 = vadd.xlane.f32.xlu0 %v1026
    %v1028 = vpop.xlane.xlu0 %1027
    %v1029 = vadd.f32 %v1025, %v1028
    %vm1030 = vcmp.gt.f32.partialorder %v983, 0.0
    %v1031 = vmul.f32 %v983, 0.01
    %v1032 = vsel %vm1030, %v983, %v1031
    %v1033 = vmul.f32 %v608, %v995
    %1034 = vadd.xlane.f32.xlu0 %v1033
    %v1035 = vpop.xlane.xlu0 %1034
    %v1036 = vmul.f32 %v1032, %v1004
    %1037 = vadd.xlane.f32.xlu0 %v1036
    %v1038 = vpop.xlane.xlu0 %1037
    %v1039 = vadd.f32 %v1035, %v1038
    %vm1040 = vcmp.gt.f32.partialorder %v984, 0.0
    %v1041 = vmul.f32 %v984, 0.01
    %v1042 = vsel %vm1040, %v984, %v1041
    %v1043 = vmul.f32 %v609, %v995
    %1044 = vadd.xlane.f32.xlu0 %v1043
    %v1045 = vpop.xlane.xlu0 %1044
    %v1046 = vmul.f32 %v1042, %v1004
    %1047 = vadd.xlane.f32.xlu0 %v1046
    %v1048 = vpop.xlane.xlu0 %1047
    %v1049 = vadd.f32 %v1045, %v1048
    %vm1050 = vcmp.gt.f32.partialorder %v985, 0.0
    %v1051 = vmul.f32 %v985, 0.01
    %v1052 = vsel %vm1050, %v985, %v1051
    %v1053 = vmul.f32 %v610, %v995
    %1054 = vadd.xlane.f32.xlu0 %v1053
    %v1055 = vpop.xlane.xlu0 %1054
    %v1056 = vmul.f32 %v1052, %v1004
    %1057 = vadd.xlane.f32.xlu0 %v1056
    %v1058 = vpop.xlane.xlu0 %1057
    %v1059 = vadd.f32 %v1055, %v1058
    %vm1060 = vcmask 7168
    %v1061 = vsel %vm1060, 0.0, %v1009
    %vm1062 = vcmask 15360
    %v1063 = vsel %vm1062, %v1061, %v1019
    %vm1064 = vcmask 23552
    %v1065 = vsel %vm1064, %v1063, %v1029
    %vm1066 = vcmask 31744
    %v1067 = vsel %vm1066, %v1065, %v1039
    %vm1068 = vcmask 39936
    %v1069 = vsel %vm1068, %v1067, %v1049
    %vm1070 = vcmask 48128
    %v1071 = vsel %vm1070, %v1069, %v1059
    %vm1072 = vcmask 56320
    %v1073 = vsel %vm1072, %v1071, 0.0
    %v1074 = vld [vmem:[#allocation5] sm:$0xff]
    %v1075 = vadd.f32 %v1073, %v1074
    %1076 = vmax.xlane.f32.xlu0 %v1075
    %v1077 = vpop.xlane.xlu0 %1076
    %v1078 = vsub.f32 %v1075, %v1077
    %v1079 = vmul.f32 %v1078, 1.442695
    %v1080 = vpow.pop %v1079
    %1081 = vadd.xlane.f32.xlu0 %v1080
    %v1082 = vpop.xlane.xlu0 %1081
    %v1083 = vrcp.pop %v1082
    %v1084 = vmul.f32 %v1080, %v1083
    %1085 = vst [vmem:[#allocation13] sm:$0xff] %v1084
    // Predicated region
    $region58: #{tpu_custom_call.1} parent=1 // pred_check
      _
    $region59: #{tpu_custom_call.1} parent=1 // pred_check_branch
      %1087 = sbr.rel (0) target = $region61
    $region60: #{tpu_custom_call.1} parent=1 // pred_region
      %s1089 = ssub.s32 128, 128
      %1090 = vsyncadd [#allocation4], %s1089
      %s1092 = sshll.u32 [#allocation13], 4
      %s1093 = int_to_ptr.vmem [resolvable:$true] %s1092
      %1095 = dma.vmem_to_hbm [thread:$0]  %s1093, 128, %s8, [#allocation4]
    $region61: #{tpu_custom_call.1} parent=1 // pred_fallthru
      _
    // Predicated region
    $region62: #{tpu_custom_call.1} parent=1 // pred_check
      _
    $region63: #{tpu_custom_call.1} parent=1 // pred_check_branch
      %1097 = sbr.rel (0) target = $region65
    $region64: #{tpu_custom_call.1} parent=1 // pred_region
      %1098 = dma.done [#allocation4], 128
    $region65: #{tpu_custom_call.1} parent=1 // pred_fallthru
      _
    %1099 = vsyncpa [#allocation3], 1
    %1100 = vsyncpa [#allocation6], 1
    %1101 = vsyncpa [#allocation9], 1
    %1102 = vsyncpa [#allocation12], 1
    %1103 = vsyncpa [#allocation4], 1

</llo_original>
